<compile_context>
chip_gen: v5e
topology: v5e:2x2
jax: 0.10.0
libtpu: 0.0.40
codegen_flags: <defaults>
</compile_context>

<pallas_src>
import jax
import jax.numpy as jnp
from jax.experimental import pallas as pl
from jax.experimental.pallas import tpu as pltpu

# ---------------- model dims (small, consistent with the module) -------------
B = 2         # batch
S = 8         # sequence length
H = 32        # ptm.config.hidden_size
NH = 4        # attention heads
HD = H // NH  # head dim
F = 64        # FFN intermediate
V = 100       # vocab size
N = 2 * B     # query rows + title rows stacked
EPS = 1e-5    # nn.LayerNorm default
LANES = 128

# ----- packed parameter-slab row layout (f32 [SLAB_ROWS, 128]) ---------------
R_BQKV, R_BO, R_G1, R_BE1, R_B1, R_B2, R_G2, R_BE2 = range(8)
R_GM = 8                    # NH rows: head one-hot masks over the H lanes
R_BCLS = R_GM + NH          # classifier bias (2 valid lanes)
SLAB_ROWS = R_BCLS + 1      # = 13


def _layernorm(x, g, b):
    mu = jnp.mean(x, axis=-1, keepdims=True)
    var = jnp.mean((x - mu) ** 2, axis=-1, keepdims=True)
    return (x - mu) * jax.lax.rsqrt(var + EPS) * g + b


# ------------------------------ fused kernel ---------------------------------
def fused_forward_kernel(x_ref, mask_ref, wqkv_ref, wo_ref, w1_ref, w2_ref,
                         wcls_ref, vecs_ref, out_ref):
    f32, bf16 = jnp.float32, jnp.bfloat16

    x = x_ref[...]                              # [N, S, H] f32
    mask = mask_ref[...]                        # [N, S]    f32 (1.0 = valid)
    vecs = vecs_ref[...]                        # [13, 128] f32 packed slab

    bqkv = vecs[R_BQKV:R_BQKV + 1, :3 * H]      # [1, 3H]
    bo   = vecs[R_BO:R_BO + 1, :H]
    g1   = vecs[R_G1:R_G1 + 1, :H]
    be1  = vecs[R_BE1:R_BE1 + 1, :H]
    b1   = vecs[R_B1:R_B1 + 1, :F]
    b2   = vecs[R_B2:R_B2 + 1, :H]
    g2   = vecs[R_G2:R_G2 + 1, :H]
    be2  = vecs[R_BE2:R_BE2 + 1, :H]
    gm   = vecs[R_GM:R_GM + NH, :H]             # [NH, H] head one-hot masks
    bcls = vecs[R_BCLS:R_BCLS + 1, :]           # [1, 128]

    x2d = x.reshape(N * S, H)                   # [N*S, H]

    # ---- fused QKV projection: one bf16 MXU matmul for all rows & heads ----
    qkv = jnp.dot(x2d.astype(bf16), wqkv_ref[...],
                  preferred_element_type=f32) + bqkv           # [N*S, 3H] f32
    q3 = qkv[:, :H].reshape(N, S, H)
    k3 = qkv[:, H:2 * H].reshape(N, S, H)
    v3 = qkv[:, 2 * H:].reshape(N, S, H)

    # ---- head-masked batched attention (no per-head slices / concats) ------
    # qg[n, h*S+s, :] = q3[n, s, :] * gm[h, :]  -> per-head scores via one
    # batched einsum contracting the full H width (masked lanes contribute 0).
    qg = (q3[:, None, :, :] * gm[None, :, None, :]).reshape(N, NH * S, H)
    scale = 1.0 / float(HD) ** 0.5
    sc = jnp.einsum('nrj,nkj->nrk', qg.astype(bf16), k3.astype(bf16),
                    preferred_element_type=f32) * scale        # [N, NH*S, S]
    sc = sc.reshape(N, NH, S, S) + ((mask - 1.0) * 1e9)[:, None, None, :]

    # single stacked softmax over all rows and heads (f32)
    sc = sc - jnp.max(sc, axis=-1, keepdims=True)
    ex = jnp.exp(sc)
    p = ex * pl.reciprocal(jnp.sum(ex, axis=-1, keepdims=True), approx=True)

    pr = p.reshape(N, NH * S, S)
    cH = jnp.einsum('nrk,nkj->nrj', pr.astype(bf16), v3.astype(bf16),
                    preferred_element_type=f32)                # [N, NH*S, H]
    cH4 = cH.reshape(N, NH, S, H)
    # select each lane's own head with the one-hot mask (pure VPU, no concat)
    ctx3 = cH4[:, 0] * gm[0:1, :]
    for h in range(1, NH):
        ctx3 = ctx3 + cH4[:, h] * gm[h:h + 1, :]               # [N, S, H]

    # ---- output projection + residual + LayerNorm ---------------------------
    attn = jnp.dot(ctx3.reshape(N * S, H).astype(bf16), wo_ref[...],
                   preferred_element_type=f32) + bo
    h1 = _layernorm(x2d + attn, g1, be1)

    # ---- FFN ----------------------------------------------------------------
    ffn = jnp.dot(h1.astype(bf16), w1_ref[...],
                  preferred_element_type=f32) + b1
    ffn = jax.nn.gelu(ffn, approximate=True)
    ffn = jnp.dot(ffn.astype(bf16), w2_ref[...],
                  preferred_element_type=f32) + b2
    h2 = _layernorm(h1 + ffn, g2, be2)                         # [N*S, H]

    # ---- masked mean pooling (f32) ------------------------------------------
    h2_3d = h2.reshape(N, S, H)
    msum = jnp.sum(h2_3d * mask[:, :, None], axis=1)           # [N, H]
    denom = jnp.maximum(jnp.sum(mask, axis=-1, keepdims=True), 1.0)
    pooled = msum * pl.reciprocal(denom, approx=True)          # [N, H]

    # ---- classifier epilogue: ONE dot against a 128-lane padded weight ------
    q_emb = pooled[:B]                                         # [B, H]
    t_emb = pooled[B:]                                         # [B, H]
    proj = jnp.concatenate([q_emb, t_emb, jnp.abs(q_emb - t_emb)], axis=-1)
    logits = jnp.dot(proj.astype(bf16), wcls_ref[...],
                     preferred_element_type=f32) + bcls        # [B, 128]
    out_ref[...] = logits                                      # lane-dense


def fused_forward(x_all, mask_all, wqkv, wo, w1, w2, wcls_pad, vecs):
    vmem = pl.BlockSpec(memory_space=pltpu.MemorySpace.VMEM)
    return pl.pallas_call(
        fused_forward_kernel,
        out_shape=jax.ShapeDtypeStruct((B, LANES), jnp.float32),
        in_specs=[vmem] * 8,
        out_specs=vmem,
    )(x_all, mask_all, wqkv, wo, w1, w2, wcls_pad, vecs)


# ----------------------------- parameter init --------------------------------
def init_params(key):
    ks = jax.random.split(key, 16)
    std = 0.02
    p = {
        "word_emb": jax.random.normal(ks[0], (V, H), jnp.float32) * std,
        "pos_emb":  jax.random.normal(ks[1], (S, H), jnp.float32) * std,
        "type_emb": jax.random.normal(ks[2], (2, H), jnp.float32) * std,
        "wq": jax.random.normal(ks[3], (H, H), jnp.float32) * std,
        "bq": jnp.zeros((1, H), jnp.float32),
        "wk": jax.random.normal(ks[4], (H, H), jnp.float32) * std,
        "bk": jnp.zeros((1, H), jnp.float32),
        "wv": jax.random.normal(ks[5], (H, H), jnp.float32) * std,
        "bv": jnp.zeros((1, H), jnp.float32),
        "wo": jax.random.normal(ks[6], (H, H), jnp.float32) * std,
        "bo": jnp.zeros((1, H), jnp.float32),
        "g1": jnp.ones((1, H), jnp.float32),
        "be1": jnp.zeros((1, H), jnp.float32),
        "w1": jax.random.normal(ks[7], (H, F), jnp.float32) * std,
        "b1": jnp.zeros((1, F), jnp.float32),
        "w2": jax.random.normal(ks[8], (F, H), jnp.float32) * std,
        "b2": jnp.zeros((1, H), jnp.float32),
        "g2": jnp.ones((1, H), jnp.float32),
        "be2": jnp.zeros((1, H), jnp.float32),
        "w_cls": jax.random.normal(ks[9], (3 * H, 2), jnp.float32) * std,
        "b_cls": jnp.zeros((1, 2), jnp.float32),
    }
    return p


def pack_param_slab(p):
    """All bias / LayerNorm vectors + head masks + classifier bias -> [13,128]."""
    def row(v):
        v = jnp.asarray(v, jnp.float32).reshape(1, -1)
        return jnp.pad(v, ((0, 0), (0, LANES - v.shape[-1])))
    gmask = jnp.repeat(jnp.eye(NH, dtype=jnp.float32), HD, axis=1)   # [NH, H]
    gmask = jnp.pad(gmask, ((0, 0), (0, LANES - H)))
    rows = [row(jnp.concatenate([p["bq"], p["bk"], p["bv"]], axis=1)),  # R_BQKV
            row(p["bo"]), row(p["g1"]), row(p["be1"]),
            row(p["b1"]), row(p["b2"]), row(p["g2"]), row(p["be2"]),
            gmask,                                                      # R_GM..
            row(p["b_cls"])]                                            # R_BCLS
    slab = jnp.concatenate(rows, axis=0)
    assert slab.shape == (SLAB_ROWS, LANES)
    return slab


def embed(input_ids, token_type_ids, position_ids, p):
    # glue: embedding gathers (plain JAX), output [B, S, H]
    x = (p["word_emb"][input_ids]
         + p["pos_emb"][position_ids]
         + p["type_emb"][token_type_ids])
    return x.astype(jnp.float32)


# ---------------------------------- forward -----------------------------------
def forward(q_ids, t_ids, q_tt, t_tt, pos, q_mask, t_mask, p):
    bf16 = jnp.bfloat16
    x_all = jnp.concatenate([embed(q_ids, q_tt, pos, p),
                             embed(t_ids, t_tt, pos, p)], axis=0)   # [2B, S, H]
    mask_all = jnp.concatenate([q_mask, t_mask], axis=0)            # [2B, S]
    wqkv = jnp.concatenate([p["wq"], p["wk"], p["wv"]], axis=1).astype(bf16)
    wcls_pad = jnp.pad(p["w_cls"], ((0, 0), (0, LANES - 2))).astype(bf16)
    vecs = pack_param_slab(p)
    logits_pad = fused_forward(
        x_all, mask_all, wqkv,
        p["wo"].astype(bf16), p["w1"].astype(bf16), p["w2"].astype(bf16),
        wcls_pad, vecs)                                             # [B, 128]
    return logits_pad[:, :2]


# --------------------------- pure-JAX f32 reference ---------------------------
def ref_encoder_pool(x, mask, p):
    M = x.shape[0]
    bias = ((mask - 1.0) * 1e9)[:, None, None, :]            # [M, 1, 1, S]
    q = x @ p["wq"] + p["bq"]
    k = x @ p["wk"] + p["bk"]
    v = x @ p["wv"] + p["bv"]
    qh = q.reshape(M, S, NH, HD).transpose(0, 2, 1, 3)
    kh = k.reshape(M, S, NH, HD).transpose(0, 2, 1, 3)
    vh = v.reshape(M, S, NH, HD).transpose(0, 2, 1, 3)
    sc = jnp.einsum('mhqd,mhkd->mhqk', qh, kh) / float(HD) ** 0.5 + bias
    pr = jax.nn.softmax(sc, axis=-1)
    ctx = jnp.einsum('mhqk,mhkd->mhqd', pr, vh)
    ctx = ctx.transpose(0, 2, 1, 3).reshape(M, S, H)
    attn = ctx @ p["wo"] + p["bo"]
    h1 = _layernorm(x + attn, p["g1"], p["be1"])
    ffn = jax.nn.gelu(h1 @ p["w1"] + p["b1"], approximate=True) @ p["w2"] + p["b2"]
    h2 = _layernorm(h1 + ffn, p["g2"], p["be2"])
    denom = jnp.maximum(jnp.sum(mask, axis=-1, keepdims=True), 1.0)
    pooled = jnp.einsum('ms,msh->mh', mask, h2) / denom
    return pooled


def ref_forward(q_ids, t_ids, q_tt, t_tt, pos, q_mask, t_mask, p):
    qe = ref_encoder_pool(embed(q_ids, q_tt, pos, p), q_mask, p)
    te = ref_encoder_pool(embed(t_ids, t_tt, pos, p), t_mask, p)
    proj = jnp.concatenate([qe, te, jnp.abs(qe - te)], axis=-1)
    return proj @ p["w_cls"] + p["b_cls"]


# ------------------------------------ main -------------------------------------
if __name__ == "__main__":
    key = jax.random.PRNGKey(0)
    kp, kq, kt = jax.random.split(key, 3)
    params = init_params(kp)

    query_input_ids = jax.random.randint(kq, (B, S), 0, V, dtype=jnp.int32)
    title_input_ids = jax.random.randint(kt, (B, S), 0, V, dtype=jnp.int32)
    token_type_ids = jnp.zeros((B, S), jnp.int32)
    position_ids = jnp.broadcast_to(jnp.arange(S, dtype=jnp.int32), (B, S))

    q_lens = jnp.array([8, 5], jnp.int32)
    t_lens = jnp.array([6, 8], jnp.int32)
    ar = jnp.arange(S, dtype=jnp.int32)
    query_attention_mask = (ar[None, :] < q_lens[:, None]).astype(jnp.float32)
    title_attention_mask = (ar[None, :] < t_lens[:, None]).astype(jnp.float32)

    fwd = jax.jit(forward)
    logits = fwd(query_input_ids, title_input_ids,
                 token_type_ids, token_type_ids, position_ids,
                 query_attention_mask, title_attention_mask, params)
    logits = jax.block_until_ready(logits)

    ref = ref_forward(query_input_ids, title_input_ids,
                      token_type_ids, token_type_ids, position_ids,
                      query_attention_mask, title_attention_mask, params)
    assert logits.shape == (B, 2)
    # kernel uses bf16 MXU operands with f32 accumulation + approx reciprocals;
    # the reference is pure f32.
    assert jnp.allclose(logits, ref, rtol=1e-2, atol=1e-2), (logits, ref)

    print("KERNEL_OK")
</pallas_src>

<mosaic_0001>
module attributes {stable_mosaic.version = 11 : i64} {
  func.func @fused_forward_kernel(%arg0: memref<4x8x32xf32, #tpu.memory_space<vmem>>, %arg1: memref<4x8xf32, #tpu.memory_space<vmem>>, %arg2: memref<32x96xbf16, #tpu.memory_space<vmem>>, %arg3: memref<32x32xbf16, #tpu.memory_space<vmem>>, %arg4: memref<32x64xbf16, #tpu.memory_space<vmem>>, %arg5: memref<64x32xbf16, #tpu.memory_space<vmem>>, %arg6: memref<96x128xbf16, #tpu.memory_space<vmem>>, %arg7: memref<13x128xf32, #tpu.memory_space<vmem>>, %arg8: memref<2x128xf32, #tpu.memory_space<vmem>>) attributes {dimension_semantics = [], scalar_prefetch = 0 : i64, scratch_operands = 0 : i64, tpu.core_type = #tpu.core_type<tc>} {
    %c0 = arith.constant 0 : index
    %c0_0 = arith.constant 0 : index
    %c0_1 = arith.constant 0 : index
    %0 = vector.load %arg0[%c0, %c0_0, %c0_1] : memref<4x8x32xf32, #tpu.memory_space<vmem>>, vector<4x8x32xf32>
    %c0_2 = arith.constant 0 : index
    %c0_3 = arith.constant 0 : index
    %1 = vector.load %arg1[%c0_2, %c0_3] : memref<4x8xf32, #tpu.memory_space<vmem>>, vector<4x8xf32>
    %c0_4 = arith.constant 0 : index
    %c0_5 = arith.constant 0 : index
    %2 = vector.load %arg7[%c0_4, %c0_5] : memref<13x128xf32, #tpu.memory_space<vmem>>, vector<13x128xf32>
    %3 = vector.extract_strided_slice %2 {offsets = [0, 0], sizes = [1, 96], strides = [1, 1]} : vector<13x128xf32> to vector<1x96xf32>
    %4 = vector.extract_strided_slice %2 {offsets = [1, 0], sizes = [1, 32], strides = [1, 1]} : vector<13x128xf32> to vector<1x32xf32>
    %5 = vector.extract_strided_slice %2 {offsets = [2, 0], sizes = [1, 32], strides = [1, 1]} : vector<13x128xf32> to vector<1x32xf32>
    %6 = vector.extract_strided_slice %2 {offsets = [3, 0], sizes = [1, 32], strides = [1, 1]} : vector<13x128xf32> to vector<1x32xf32>
    %7 = vector.extract_strided_slice %2 {offsets = [4, 0], sizes = [1, 64], strides = [1, 1]} : vector<13x128xf32> to vector<1x64xf32>
    %8 = vector.extract_strided_slice %2 {offsets = [5, 0], sizes = [1, 32], strides = [1, 1]} : vector<13x128xf32> to vector<1x32xf32>
    %9 = vector.extract_strided_slice %2 {offsets = [6, 0], sizes = [1, 32], strides = [1, 1]} : vector<13x128xf32> to vector<1x32xf32>
    %10 = vector.extract_strided_slice %2 {offsets = [7, 0], sizes = [1, 32], strides = [1, 1]} : vector<13x128xf32> to vector<1x32xf32>
    %11 = vector.extract_strided_slice %2 {offsets = [8, 0], sizes = [4, 32], strides = [1, 1]} : vector<13x128xf32> to vector<4x32xf32>
    %12 = vector.extract_strided_slice %2 {offsets = [12, 0], sizes = [1, 128], strides = [1, 1]} : vector<13x128xf32> to vector<1x128xf32>
    %13 = vector.shape_cast %0 : vector<4x8x32xf32> to vector<32x32xf32>
    %14 = arith.truncf %13 : vector<32x32xf32> to vector<32x32xbf16>
    %c0_6 = arith.constant 0 : index
    %c0_7 = arith.constant 0 : index
    %15 = vector.load %arg2[%c0_6, %c0_7] : memref<32x96xbf16, #tpu.memory_space<vmem>>, vector<32x96xbf16>
    %cst = arith.constant dense<0.000000e+00> : vector<32x96xf32>
    %16 = tpu.matmul %14, %15, %cst {dimension_numbers = #tpu.dot_dimension_numbers<[1], [0], [0], [1], [0, 0, 1, 1], [], []>} : vector<32x32xbf16>, vector<32x96xbf16>, vector<32x96xf32> -> vector<32x96xf32>
    %17 = vector.broadcast %3 : vector<1x96xf32> to vector<32x96xf32>
    %18 = arith.addf %16, %17 : vector<32x96xf32>
    %19 = vector.extract_strided_slice %18 {offsets = [0, 0], sizes = [32, 32], strides = [1, 1]} : vector<32x96xf32> to vector<32x32xf32>
    %20 = vector.shape_cast %19 : vector<32x32xf32> to vector<4x8x32xf32>
    %21 = vector.extract_strided_slice %18 {offsets = [0, 32], sizes = [32, 32], strides = [1, 1]} : vector<32x96xf32> to vector<32x32xf32>
    %22 = vector.shape_cast %21 : vector<32x32xf32> to vector<4x8x32xf32>
    %23 = vector.extract_strided_slice %18 {offsets = [0, 64], sizes = [32, 32], strides = [1, 1]} : vector<32x96xf32> to vector<32x32xf32>
    %24 = vector.shape_cast %23 : vector<32x32xf32> to vector<4x8x32xf32>
    %25 = vector.shape_cast %20 : vector<4x8x32xf32> to vector<4x1x8x32xf32>
    %26 = vector.shape_cast %11 : vector<4x32xf32> to vector<1x4x1x32xf32>
    %27 = vector.broadcast %25 : vector<4x1x8x32xf32> to vector<4x4x8x32xf32>
    %28 = vector.broadcast %26 : vector<1x4x1x32xf32> to vector<4x4x8x32xf32>
    %29 = arith.mulf %27, %28 : vector<4x4x8x32xf32>
    %30 = vector.shape_cast %29 : vector<4x4x8x32xf32> to vector<4x32x32xf32>
    %31 = arith.truncf %30 : vector<4x32x32xf32> to vector<4x32x32xbf16>
    %32 = arith.truncf %22 : vector<4x8x32xf32> to vector<4x8x32xbf16>
    "tpu.trace_start"() <{level = 10 : i32, message = "nrj,nkj->nrk"}> : () -> ()
    %cst_8 = arith.constant dense<0.000000e+00> : vector<4x32x8xf32>
    %33 = tpu.matmul %31, %32, %cst_8 {dimension_numbers = #tpu.dot_dimension_numbers<[2], [2], [1], [1], [0, 0, 0, 1, 1, 1], [0], [0]>} : vector<4x32x32xbf16>, vector<4x8x32xbf16>, vector<4x32x8xf32> -> vector<4x32x8xf32>
    "tpu.trace_stop"() : () -> ()
    %cst_9 = arith.constant 0.353553385 : f32
    %34 = vector.broadcast %cst_9 : f32 to vector<4x32x8xf32>
    %35 = arith.mulf %33, %34 : vector<4x32x8xf32>
    %36 = vector.shape_cast %35 : vector<4x32x8xf32> to vector<4x4x8x8xf32>
    %cst_10 = arith.constant 1.000000e+00 : f32
    %37 = vector.broadcast %cst_10 : f32 to vector<4x8xf32>
    %38 = arith.subf %1, %37 : vector<4x8xf32>
    %cst_11 = arith.constant 1.000000e+09 : f32
    %39 = vector.broadcast %cst_11 : f32 to vector<4x8xf32>
    %40 = arith.mulf %38, %39 : vector<4x8xf32>
    %41 = vector.shape_cast %40 : vector<4x8xf32> to vector<4x1x1x8xf32>
    %42 = vector.broadcast %41 : vector<4x1x1x8xf32> to vector<4x4x8x8xf32>
    %43 = arith.addf %36, %42 : vector<4x4x8x8xf32>
    %cst_12 = arith.constant dense<0xFF800000> : vector<4x4x8xf32>
    %44 = vector.multi_reduction <maximumf>, %43, %cst_12 [3] : vector<4x4x8x8xf32> to vector<4x4x8xf32>
    %45 = vector.shape_cast %44 : vector<4x4x8xf32> to vector<4x4x8x1xf32>
    %46 = vector.broadcast %45 : vector<4x4x8x1xf32> to vector<4x4x8x8xf32>
    %47 = arith.subf %43, %46 : vector<4x4x8x8xf32>
    %48 = math.exp %47 : vector<4x4x8x8xf32>
    %cst_13 = arith.constant dense<0.000000e+00> : vector<4x4x8xf32>
    %49 = vector.multi_reduction <add>, %48, %cst_13 [3] : vector<4x4x8x8xf32> to vector<4x4x8xf32>
    %50 = vector.shape_cast %49 : vector<4x4x8xf32> to vector<4x4x8x1xf32>
    %51 = tpu.reciprocal %50 {approx = true} : vector<4x4x8x1xf32> -> vector<4x4x8x1xf32>
    %52 = vector.broadcast %51 : vector<4x4x8x1xf32> to vector<4x4x8x8xf32>
    %53 = arith.mulf %48, %52 : vector<4x4x8x8xf32>
    %54 = vector.shape_cast %53 : vector<4x4x8x8xf32> to vector<4x32x8xf32>
    %55 = arith.truncf %54 : vector<4x32x8xf32> to vector<4x32x8xbf16>
    %56 = arith.truncf %24 : vector<4x8x32xf32> to vector<4x8x32xbf16>
    "tpu.trace_start"() <{level = 10 : i32, message = "nrk,nkj->nrj"}> : () -> ()
    %cst_14 = arith.constant dense<0.000000e+00> : vector<4x32x32xf32>
    %57 = tpu.matmul %55, %56, %cst_14 {dimension_numbers = #tpu.dot_dimension_numbers<[2], [1], [1], [2], [0, 0, 0, 1, 1, 2], [0], [0]>} : vector<4x32x8xbf16>, vector<4x8x32xbf16>, vector<4x32x32xf32> -> vector<4x32x32xf32>
    "tpu.trace_stop"() : () -> ()
    %58 = vector.shape_cast %57 : vector<4x32x32xf32> to vector<4x4x8x32xf32>
    %59 = vector.extract_strided_slice %58 {offsets = [0, 0, 0, 0], sizes = [4, 1, 8, 32], strides = [1, 1, 1, 1]} : vector<4x4x8x32xf32> to vector<4x1x8x32xf32>
    %60 = vector.shape_cast %59 : vector<4x1x8x32xf32> to vector<4x8x32xf32>
    %61 = vector.extract_strided_slice %11 {offsets = [0, 0], sizes = [1, 32], strides = [1, 1]} : vector<4x32xf32> to vector<1x32xf32>
    %62 = vector.shape_cast %61 : vector<1x32xf32> to vector<1x1x32xf32>
    %63 = vector.broadcast %62 : vector<1x1x32xf32> to vector<4x8x32xf32>
    %64 = arith.mulf %60, %63 : vector<4x8x32xf32>
    %65 = vector.extract_strided_slice %58 {offsets = [0, 1, 0, 0], sizes = [4, 1, 8, 32], strides = [1, 1, 1, 1]} : vector<4x4x8x32xf32> to vector<4x1x8x32xf32>
    %66 = vector.shape_cast %65 : vector<4x1x8x32xf32> to vector<4x8x32xf32>
    %67 = vector.extract_strided_slice %11 {offsets = [1, 0], sizes = [1, 32], strides = [1, 1]} : vector<4x32xf32> to vector<1x32xf32>
    %68 = vector.shape_cast %67 : vector<1x32xf32> to vector<1x1x32xf32>
    %69 = vector.broadcast %68 : vector<1x1x32xf32> to vector<4x8x32xf32>
    %70 = arith.mulf %66, %69 : vector<4x8x32xf32>
    %71 = arith.addf %64, %70 : vector<4x8x32xf32>
    %72 = vector.extract_strided_slice %58 {offsets = [0, 2, 0, 0], sizes = [4, 1, 8, 32], strides = [1, 1, 1, 1]} : vector<4x4x8x32xf32> to vector<4x1x8x32xf32>
    %73 = vector.shape_cast %72 : vector<4x1x8x32xf32> to vector<4x8x32xf32>
    %74 = vector.extract_strided_slice %11 {offsets = [2, 0], sizes = [1, 32], strides = [1, 1]} : vector<4x32xf32> to vector<1x32xf32>
    %75 = vector.shape_cast %74 : vector<1x32xf32> to vector<1x1x32xf32>
    %76 = vector.broadcast %75 : vector<1x1x32xf32> to vector<4x8x32xf32>
    %77 = arith.mulf %73, %76 : vector<4x8x32xf32>
    %78 = arith.addf %71, %77 : vector<4x8x32xf32>
    %79 = vector.extract_strided_slice %58 {offsets = [0, 3, 0, 0], sizes = [4, 1, 8, 32], strides = [1, 1, 1, 1]} : vector<4x4x8x32xf32> to vector<4x1x8x32xf32>
    %80 = vector.shape_cast %79 : vector<4x1x8x32xf32> to vector<4x8x32xf32>
    %81 = vector.extract_strided_slice %11 {offsets = [3, 0], sizes = [1, 32], strides = [1, 1]} : vector<4x32xf32> to vector<1x32xf32>
    %82 = vector.shape_cast %81 : vector<1x32xf32> to vector<1x1x32xf32>
    %83 = vector.broadcast %82 : vector<1x1x32xf32> to vector<4x8x32xf32>
    %84 = arith.mulf %80, %83 : vector<4x8x32xf32>
    %85 = arith.addf %78, %84 : vector<4x8x32xf32>
    %86 = vector.shape_cast %85 : vector<4x8x32xf32> to vector<32x32xf32>
    %87 = arith.truncf %86 : vector<32x32xf32> to vector<32x32xbf16>
    %c0_15 = arith.constant 0 : index
    %c0_16 = arith.constant 0 : index
    %88 = vector.load %arg3[%c0_15, %c0_16] : memref<32x32xbf16, #tpu.memory_space<vmem>>, vector<32x32xbf16>
    %cst_17 = arith.constant dense<0.000000e+00> : vector<32x32xf32>
    %89 = tpu.matmul %87, %88, %cst_17 {dimension_numbers = #tpu.dot_dimension_numbers<[1], [0], [0], [1], [0, 0, 1, 1], [], []>} : vector<32x32xbf16>, vector<32x32xbf16>, vector<32x32xf32> -> vector<32x32xf32>
    %90 = vector.broadcast %4 : vector<1x32xf32> to vector<32x32xf32>
    %91 = arith.addf %89, %90 : vector<32x32xf32>
    %92 = arith.addf %13, %91 : vector<32x32xf32>
    %cst_18 = arith.constant dense<0.000000e+00> : vector<32xf32>
    %93 = vector.multi_reduction <add>, %92, %cst_18 [1] : vector<32x32xf32> to vector<32xf32>
    %94 = vector.shape_cast %93 : vector<32xf32> to vector<32x1xf32>
    %cst_19 = arith.constant 3.200000e+01 : f32
    %95 = vector.broadcast %cst_19 : f32 to vector<32x1xf32>
    %96 = arith.divf %94, %95 : vector<32x1xf32>
    %97 = vector.broadcast %96 : vector<32x1xf32> to vector<32x32xf32>
    %98 = arith.subf %92, %97 : vector<32x32xf32>
    %99 = arith.mulf %98, %98 : vector<32x32xf32>
    %cst_20 = arith.constant dense<0.000000e+00> : vector<32xf32>
    %100 = vector.multi_reduction <add>, %99, %cst_20 [1] : vector<32x32xf32> to vector<32xf32>
    %101 = vector.shape_cast %100 : vector<32xf32> to vector<32x1xf32>
    %cst_21 = arith.constant 3.200000e+01 : f32
    %102 = vector.broadcast %cst_21 : f32 to vector<32x1xf32>
    %103 = arith.divf %101, %102 : vector<32x1xf32>
    %104 = vector.broadcast %96 : vector<32x1xf32> to vector<32x32xf32>
    %105 = arith.subf %92, %104 : vector<32x32xf32>
    %cst_22 = arith.constant 9.99999974E-6 : f32
    %106 = vector.broadcast %cst_22 : f32 to vector<32x1xf32>
    %107 = arith.addf %103, %106 : vector<32x1xf32>
    %108 = math.rsqrt %107 : vector<32x1xf32>
    %109 = vector.broadcast %108 : vector<32x1xf32> to vector<32x32xf32>
    %110 = arith.mulf %105, %109 : vector<32x32xf32>
    %111 = vector.broadcast %5 : vector<1x32xf32> to vector<32x32xf32>
    %112 = arith.mulf %110, %111 : vector<32x32xf32>
    %113 = vector.broadcast %6 : vector<1x32xf32> to vector<32x32xf32>
    %114 = arith.addf %112, %113 : vector<32x32xf32>
    %115 = arith.truncf %114 : vector<32x32xf32> to vector<32x32xbf16>
    %c0_23 = arith.constant 0 : index
    %c0_24 = arith.constant 0 : index
    %116 = vector.load %arg4[%c0_23, %c0_24] : memref<32x64xbf16, #tpu.memory_space<vmem>>, vector<32x64xbf16>
    %cst_25 = arith.constant dense<0.000000e+00> : vector<32x64xf32>
    %117 = tpu.matmul %115, %116, %cst_25 {dimension_numbers = #tpu.dot_dimension_numbers<[1], [0], [0], [1], [0, 0, 1, 1], [], []>} : vector<32x32xbf16>, vector<32x64xbf16>, vector<32x64xf32> -> vector<32x64xf32>
    %118 = vector.broadcast %7 : vector<1x64xf32> to vector<32x64xf32>
    %119 = arith.addf %117, %118 : vector<32x64xf32>
    %120 = arith.mulf %119, %119 : vector<32x64xf32>
    %121 = arith.mulf %119, %120 : vector<32x64xf32>
    %cst_26 = arith.constant 4.471500e-02 : f32
    %122 = vector.broadcast %cst_26 : f32 to vector<32x64xf32>
    %123 = arith.mulf %122, %121 : vector<32x64xf32>
    %124 = arith.addf %119, %123 : vector<32x64xf32>
    %cst_27 = arith.constant 0.797884583 : f32
    %125 = vector.broadcast %cst_27 : f32 to vector<32x64xf32>
    %126 = arith.mulf %125, %124 : vector<32x64xf32>
    %127 = math.tanh %126 : vector<32x64xf32>
    %cst_28 = arith.constant 1.000000e+00 : f32
    %128 = vector.broadcast %cst_28 : f32 to vector<32x64xf32>
    %129 = arith.addf %128, %127 : vector<32x64xf32>
    %cst_29 = arith.constant 5.000000e-01 : f32
    %130 = vector.broadcast %cst_29 : f32 to vector<32x64xf32>
    %131 = arith.mulf %130, %129 : vector<32x64xf32>
    %132 = arith.mulf %119, %131 : vector<32x64xf32>
    %133 = arith.truncf %132 : vector<32x64xf32> to vector<32x64xbf16>
    %c0_30 = arith.constant 0 : index
    %c0_31 = arith.constant 0 : index
    %134 = vector.load %arg5[%c0_30, %c0_31] : memref<64x32xbf16, #tpu.memory_space<vmem>>, vector<64x32xbf16>
    %cst_32 = arith.constant dense<0.000000e+00> : vector<32x32xf32>
    %135 = tpu.matmul %133, %134, %cst_32 {dimension_numbers = #tpu.dot_dimension_numbers<[1], [0], [0], [1], [0, 0, 1, 1], [], []>} : vector<32x64xbf16>, vector<64x32xbf16>, vector<32x32xf32> -> vector<32x32xf32>
    %136 = vector.broadcast %8 : vector<1x32xf32> to vector<32x32xf32>
    %137 = arith.addf %135, %136 : vector<32x32xf32>
    %138 = arith.addf %114, %137 : vector<32x32xf32>
    %cst_33 = arith.constant dense<0.000000e+00> : vector<32xf32>
    %139 = vector.multi_reduction <add>, %138, %cst_33 [1] : vector<32x32xf32> to vector<32xf32>
    %140 = vector.shape_cast %139 : vector<32xf32> to vector<32x1xf32>
    %cst_34 = arith.constant 3.200000e+01 : f32
    %141 = vector.broadcast %cst_34 : f32 to vector<32x1xf32>
    %142 = arith.divf %140, %141 : vector<32x1xf32>
    %143 = vector.broadcast %142 : vector<32x1xf32> to vector<32x32xf32>
    %144 = arith.subf %138, %143 : vector<32x32xf32>
    %145 = arith.mulf %144, %144 : vector<32x32xf32>
    %cst_35 = arith.constant dense<0.000000e+00> : vector<32xf32>
    %146 = vector.multi_reduction <add>, %145, %cst_35 [1] : vector<32x32xf32> to vector<32xf32>
    %147 = vector.shape_cast %146 : vector<32xf32> to vector<32x1xf32>
    %cst_36 = arith.constant 3.200000e+01 : f32
    %148 = vector.broadcast %cst_36 : f32 to vector<32x1xf32>
    %149 = arith.divf %147, %148 : vector<32x1xf32>
    %150 = vector.broadcast %142 : vector<32x1xf32> to vector<32x32xf32>
    %151 = arith.subf %138, %150 : vector<32x32xf32>
    %cst_37 = arith.constant 9.99999974E-6 : f32
    %152 = vector.broadcast %cst_37 : f32 to vector<32x1xf32>
    %153 = arith.addf %149, %152 : vector<32x1xf32>
    %154 = math.rsqrt %153 : vector<32x1xf32>
    %155 = vector.broadcast %154 : vector<32x1xf32> to vector<32x32xf32>
    %156 = arith.mulf %151, %155 : vector<32x32xf32>
    %157 = vector.broadcast %9 : vector<1x32xf32> to vector<32x32xf32>
    %158 = arith.mulf %156, %157 : vector<32x32xf32>
    %159 = vector.broadcast %10 : vector<1x32xf32> to vector<32x32xf32>
    %160 = arith.addf %158, %159 : vector<32x32xf32>
    %161 = vector.shape_cast %160 : vector<32x32xf32> to vector<4x8x32xf32>
    %162 = vector.shape_cast %1 : vector<4x8xf32> to vector<4x8x1xf32>
    %163 = vector.broadcast %162 : vector<4x8x1xf32> to vector<4x8x32xf32>
    %164 = arith.mulf %161, %163 : vector<4x8x32xf32>
    %cst_38 = arith.constant dense<0.000000e+00> : vector<4x32xf32>
    %165 = vector.multi_reduction <add>, %164, %cst_38 [1] : vector<4x8x32xf32> to vector<4x32xf32>
    %cst_39 = arith.constant dense<0.000000e+00> : vector<4xf32>
    %166 = vector.multi_reduction <add>, %1, %cst_39 [1] : vector<4x8xf32> to vector<4xf32>
    %167 = vector.shape_cast %166 : vector<4xf32> to vector<4x1xf32>
    %cst_40 = arith.constant 1.000000e+00 : f32
    %168 = vector.broadcast %cst_40 : f32 to vector<4x1xf32>
    %169 = arith.maximumf %167, %168 : vector<4x1xf32>
    %170 = tpu.reciprocal %169 {approx = true} : vector<4x1xf32> -> vector<4x1xf32>
    %171 = vector.broadcast %170 : vector<4x1xf32> to vector<4x32xf32>
    %172 = arith.mulf %165, %171 : vector<4x32xf32>
    %173 = vector.extract_strided_slice %172 {offsets = [0, 0], sizes = [2, 32], strides = [1, 1]} : vector<4x32xf32> to vector<2x32xf32>
    %174 = vector.extract_strided_slice %172 {offsets = [2, 0], sizes = [2, 32], strides = [1, 1]} : vector<4x32xf32> to vector<2x32xf32>
    %175 = arith.subf %173, %174 : vector<2x32xf32>
    %176 = math.absf %175 : vector<2x32xf32>
    %177 = tpu.concatenate %173, %174, %176 in 1 : vector<2x32xf32>, vector<2x32xf32>, vector<2x32xf32> -> vector<2x96xf32>
    %178 = arith.truncf %177 : vector<2x96xf32> to vector<2x96xbf16>
    %c0_41 = arith.constant 0 : index
    %c0_42 = arith.constant 0 : index
    %179 = vector.load %arg6[%c0_41, %c0_42] : memref<96x128xbf16, #tpu.memory_space<vmem>>, vector<96x128xbf16>
    %cst_43 = arith.constant dense<0.000000e+00> : vector<2x128xf32>
    %180 = tpu.matmul %178, %179, %cst_43 {dimension_numbers = #tpu.dot_dimension_numbers<[1], [0], [0], [1], [0, 0, 1, 1], [], []>} : vector<2x96xbf16>, vector<96x128xbf16>, vector<2x128xf32> -> vector<2x128xf32>
    %181 = vector.broadcast %12 : vector<1x128xf32> to vector<2x128xf32>
    %182 = arith.addf %180, %181 : vector<2x128xf32>
    %c0_44 = arith.constant 0 : index
    %c0_45 = arith.constant 0 : index
    %183 = vector.load %arg8[%c0_44, %c0_45] : memref<2x128xf32, #tpu.memory_space<vmem>>, vector<2x128xf32>
    tpu.vector_store %arg8[%c0_44, %c0_45], %182 {strides = array<i32>} : memref<2x128xf32, #tpu.memory_space<vmem>>, vector<2x128xf32>,
    return
  }
}

</mosaic_0001>

<llo_original>
// kernel: forward.1
$region0: #{forward.1}
  #allocation0 [shape = 'u32[]', space=smem, size = 0x4, offset = 0x4, fixed_abs, tag = 'smem constant byte address 0x4 - core index']
  #allocation1 [shape = 'u32[72,128]{1,0:T(1,128)}', space=vmem, size = 0x9000, scoped, tag = 'internal scratch']
  %s0 = inlined_call_operand.vmem [shape: f32[4,8,32], index: 0, kind: input, shape index: {}]
  %s1 = inlined_call_operand.vmem [shape: f32[4,8], index: 1, kind: input, shape index: {}]
  %s2 = inlined_call_operand.vmem [shape: bf16[32,96], index: 2, kind: input, shape index: {}]
  %s3 = inlined_call_operand.vmem [shape: bf16[32,32], index: 3, kind: input, shape index: {}]
  %s4 = inlined_call_operand.vmem [shape: bf16[32,64], index: 4, kind: input, shape index: {}]
  %s5 = inlined_call_operand.vmem [shape: bf16[64,32], index: 5, kind: input, shape index: {}]
  %s6 = inlined_call_operand.vmem [shape: bf16[96,128], index: 6, kind: input, shape index: {}]
  %s7 = inlined_call_operand.vmem [shape: f32[13,128], index: 7, kind: input, shape index: {}]
  %s8 = inlined_call_operand.hbm [shape: f32[2,128], index: 8, kind: output, shape index: {}]
  %s9 = sld [smem:[#allocation0]]
  $region42: #{forward.1} parent=0
    _
  %s11 = ssub.s32 1, %s9
  %s12 = scalar_select 0, %s11, %s9
  $region1: #{forward.1} parent=0
    #allocation2 [shape = 'u8[1024]{0}', space=vmem, size = 0x400, scoped, tag = 'output window, operand 0, single buffered']
    #allocation3 [shape = 's32[1]{0}', space=sflag, size = 0x4, scoped, tag = 'scoped memory for forward.1']
    %13 = vsyncpa [#allocation3], 0
    // Predicated region
    $region2: #{forward.1} parent=1 // pred_check
      _
    $region3: #{forward.1} parent=1 // pred_check_branch
      %15 = sbr.rel (0) target = $region5
    $region4: #{forward.1} parent=1 // pred_region
      _
    $region5: #{forward.1} parent=1 // pred_fallthru
      _
    // Predicated region
    $region6: #{forward.1} parent=1 // pred_check
      _
    $region7: #{forward.1} parent=1 // pred_check_branch
      %17 = sbr.rel (0) target = $region9
    $region8: #{forward.1} parent=1 // pred_region
      _
    $region9: #{forward.1} parent=1 // pred_fallthru
      _
    // Predicated region
    $region10: #{forward.1} parent=1 // pred_check
      _
    $region11: #{forward.1} parent=1 // pred_check_branch
      %19 = sbr.rel (0) target = $region13
    $region12: #{forward.1} parent=1 // pred_region
      _
    $region13: #{forward.1} parent=1 // pred_fallthru
      _
    // Predicated region
    $region14: #{forward.1} parent=1 // pred_check
      _
    $region15: #{forward.1} parent=1 // pred_check_branch
      %21 = sbr.rel (0) target = $region17
    $region16: #{forward.1} parent=1 // pred_region
      _
    $region17: #{forward.1} parent=1 // pred_fallthru
      _
    // Predicated region
    $region18: #{forward.1} parent=1 // pred_check
      _
    $region19: #{forward.1} parent=1 // pred_check_branch
      %23 = sbr.rel (0) target = $region21
    $region20: #{forward.1} parent=1 // pred_region
      _
    $region21: #{forward.1} parent=1 // pred_fallthru
      _
    // Predicated region
    $region22: #{forward.1} parent=1 // pred_check
      _
    $region23: #{forward.1} parent=1 // pred_check_branch
      %25 = sbr.rel (0) target = $region25
    $region24: #{forward.1} parent=1 // pred_region
      _
    $region25: #{forward.1} parent=1 // pred_fallthru
      _
    // Predicated region
    $region26: #{forward.1} parent=1 // pred_check
      _
    $region27: #{forward.1} parent=1 // pred_check_branch
      %27 = sbr.rel (0) target = $region29
    $region28: #{forward.1} parent=1 // pred_region
      _
    $region29: #{forward.1} parent=1 // pred_fallthru
      _
    // Predicated region
    $region30: #{forward.1} parent=1 // pred_check
      _
    $region31: #{forward.1} parent=1 // pred_check_branch
      %29 = sbr.rel (0) target = $region33
    $region32: #{forward.1} parent=1 // pred_region
      _
    $region33: #{forward.1} parent=1 // pred_fallthru
      _
    %v31 = vld [vmem:[%s0] sm:$0xff]
    %v32 = vld [vmem:[%s0 + $0x8] sm:$0xff]
    %v33 = vld [vmem:[%s0 + $0x10] sm:$0xff]
    %v34 = vld [vmem:[%s0 + $0x18] sm:$0xff]
    %v35 = vld [vmem:[%s1] sm:$0xf]
    %v36 = vld [vmem:[%s7] sm:$0xff]
    %v37 = vld [vmem:[%s7 + $0x8] sm:$0x1f]
    %v38 = vpack.c.bf16 %v32, %v31
    %v39 = vpack.c.bf16 %v34, %v33
    %v40 = vld [vmem:[%s2] sm:$0xf]
    %v41 = vld [vmem:[%s2 + $0x4] sm:$0xf]
    %v42 = vld [vmem:[%s2 + $0x8] sm:$0xf]
    %v43 = vld [vmem:[%s2 + $0xc] sm:$0xf]
    %v44 = vperm.slane %v36, 0
    %v49 = vunpack.c.l.b16 %v40
    %v50 = vunpack.c.l.b16 %v41
    %v51 = vunpack.c.l.b16 %v42
    %v52 = vunpack.c.l.b16 %v43
    %v53 = vpack.c.b16 %v50, %v49
    %v54 = vpack.c.b16 %v52, %v51
    %vm57 = vcmask 261120
    %v59 = vsel %vm57, %v38, 0
    %v62 = vsel %vm57, %v39, 0
    %64 = vmatpush.bf16.msra.mxu0 0
    %65 = vmatpush.bf16.msra.mxu0 0
    %66 = vmatpush.bf16.msra.mxu0 0
    %67 = vmatpush.bf16.msra.mxu0 0
    %68 = vmatpush.bf16.msra.mxu0 0
    %69 = vmatpush.bf16.msra.mxu0 0
    %70 = vmatpush.bf16.msra.mxu0 %v54
    %71 = vmatpush.bf16.msra.mxu0 %v53
    %72 = vmatmul.bf16.gmra.mxu0 %v59
    %v73 = vpop.f32.mrf.mxu0
    %v74 = vadd.f32 %v44, %v73
    %v75 = vpop.f32.mrf.mxu0
    %v76 = vadd.f32 %v44, %v75
    %77 = vmatmul.bf16.gmra.mxu0 %v62
    %v78 = vpop.f32.mrf.mxu0
    %v79 = vadd.f32 %v44, %v78
    %v80 = vpop.f32.mrf.mxu0
    %v81 = vadd.f32 %v44, %v80
    %82 = vdwg.mxu0
    %v84 = vrot.slane %v37, 1
    %v85 = vrot.slane %v37, 2
    %v86 = vrot.slane %v37, 3
    %v87 = vperm.slane %v37, 0
    %v88 = vperm.slane %v84, 0
    %v89 = vperm.slane %v85, 0
    %v90 = vperm.slane %v86, 0
    %v95 = vmul.f32 %v74, %v87
    %v96 = vmul.f32 %v74, %v88
    %v97 = vmul.f32 %v74, %v89
    %v98 = vmul.f32 %v74, %v90
    %v99 = vmul.f32 %v76, %v87
    %v100 = vmul.f32 %v76, %v88
    %v101 = vmul.f32 %v76, %v89
    %v102 = vmul.f32 %v76, %v90
    %v103 = vmul.f32 %v79, %v87
    %v104 = vmul.f32 %v79, %v88
    %v105 = vmul.f32 %v79, %v89
    %v106 = vmul.f32 %v79, %v90
    %v107 = vmul.f32 %v81, %v87
    %v108 = vmul.f32 %v81, %v88
    %v109 = vmul.f32 %v81, %v89
    %v110 = vmul.f32 %v81, %v90
    %v111 = vpack.c.bf16 %v95, %v95
    %v112 = vpack.c.bf16 %v96, %v96
    %v113 = vpack.c.bf16 %v97, %v97
    %v114 = vpack.c.bf16 %v98, %v98
    %v115 = vpack.c.bf16 %v99, %v99
    %v116 = vpack.c.bf16 %v100, %v100
    %v117 = vpack.c.bf16 %v101, %v101
    %v118 = vpack.c.bf16 %v102, %v102
    %v119 = vpack.c.bf16 %v103, %v103
    %v120 = vpack.c.bf16 %v104, %v104
    %v121 = vpack.c.bf16 %v105, %v105
    %v122 = vpack.c.bf16 %v106, %v106
    %v123 = vpack.c.bf16 %v107, %v107
    %v124 = vpack.c.bf16 %v108, %v108
    %v125 = vpack.c.bf16 %v109, %v109
    %v126 = vpack.c.bf16 %v110, %v110
    %v127 = vpack.c.bf16 %v74, %v74
    %v128 = vpack.c.bf16 %v76, %v76
    %v129 = vpack.c.bf16 %v79, %v79
    %v130 = vpack.c.bf16 %v81, %v81
    %v135 = vunpack.c.l.b16 %v111
    %v136 = vunpack.c.l.b16 %v112
    %v137 = vunpack.c.l.b16 %v113
    %v138 = vunpack.c.l.b16 %v114
    %v139 = vpack.c.b16 %v136, %v135
    %v140 = vpack.c.b16 %v138, %v137
    %v142 = vunpack.c.l.b16 %v127
    %v143 = vpack.c.b16 %v142, %v142
    %144 = vrot.lane.b32.xlu0 %v143, 96
    %v145 = vpop.permute.xlu0 %144
    %v147 = vsel %vm57, %v139, 0
    %v150 = vsel %vm57, %v140, 0
    %v153 = vsel %vm57, %v145, 0
    %155 = vmatpush.bf16.xpose.msra.mxu0 0
    %156 = vmatpush.bf16.xpose.msra.mxu0 0
    %157 = vmatpush.bf16.xpose.msra.mxu0 0
    %158 = vmatpush.bf16.xpose.msra.mxu0 0
    %159 = vmatpush.bf16.xpose.msra.mxu0 0
    %160 = vmatpush.bf16.xpose.msra.mxu0 0
    %161 = vmatpush.bf16.xpose.msra.mxu0 0
    %162 = vmatpush.bf16.xpose.msra.mxu0 %v153
    %163 = vmatmul.bf16.gmra.mxu0 %v147
    %v164 = vpop.f32.mrf.mxu0
    %v165 = vadd.f32 0.0, %v164
    %v166 = vpop.f32.mrf.mxu0
    %v167 = vadd.f32 0.0, %v166
    %168 = vmatmul.bf16.gmra.mxu0 %v150
    %v169 = vpop.f32.mrf.mxu0
    %v170 = vadd.f32 0.0, %v169
    %v171 = vpop.f32.mrf.mxu0
    %v172 = vadd.f32 0.0, %v171
    %173 = vdwg.mxu0
    %v178 = vunpack.c.l.b16 %v115
    %v179 = vunpack.c.l.b16 %v116
    %v180 = vunpack.c.l.b16 %v117
    %v181 = vunpack.c.l.b16 %v118
    %v182 = vpack.c.b16 %v179, %v178
    %v183 = vpack.c.b16 %v181, %v180
    %v185 = vunpack.c.l.b16 %v128
    %v186 = vpack.c.b16 %v185, %v185
    %187 = vrot.lane.b32.xlu0 %v186, 96
    %v188 = vpop.permute.xlu0 %187
    %v190 = vsel %vm57, %v182, 0
    %v193 = vsel %vm57, %v183, 0
    %v196 = vsel %vm57, %v188, 0
    %198 = vmatpush.bf16.xpose.msra.mxu0 0
    %199 = vmatpush.bf16.xpose.msra.mxu0 0
    %200 = vmatpush.bf16.xpose.msra.mxu0 0
    %201 = vmatpush.bf16.xpose.msra.mxu0 0
    %202 = vmatpush.bf16.xpose.msra.mxu0 0
    %203 = vmatpush.bf16.xpose.msra.mxu0 0
    %204 = vmatpush.bf16.xpose.msra.mxu0 0
    %205 = vmatpush.bf16.xpose.msra.mxu0 %v196
    %206 = vmatmul.bf16.gmra.mxu0 %v190
    %v207 = vpop.f32.mrf.mxu0
    %v208 = vadd.f32 0.0, %v207
    %v209 = vpop.f32.mrf.mxu0
    %v210 = vadd.f32 0.0, %v209
    %211 = vmatmul.bf16.gmra.mxu0 %v193
    %v212 = vpop.f32.mrf.mxu0
    %v213 = vadd.f32 0.0, %v212
    %v214 = vpop.f32.mrf.mxu0
    %v215 = vadd.f32 0.0, %v214
    %216 = vdwg.mxu0
    %v221 = vunpack.c.l.b16 %v119
    %v222 = vunpack.c.l.b16 %v120
    %v223 = vunpack.c.l.b16 %v121
    %v224 = vunpack.c.l.b16 %v122
    %v225 = vpack.c.b16 %v222, %v221
    %v226 = vpack.c.b16 %v224, %v223
    %v228 = vunpack.c.l.b16 %v129
    %v229 = vpack.c.b16 %v228, %v228
    %230 = vrot.lane.b32.xlu0 %v229, 96
    %v231 = vpop.permute.xlu0 %230
    %v233 = vsel %vm57, %v225, 0
    %v236 = vsel %vm57, %v226, 0
    %v239 = vsel %vm57, %v231, 0
    %241 = vmatpush.bf16.xpose.msra.mxu0 0
    %242 = vmatpush.bf16.xpose.msra.mxu0 0
    %243 = vmatpush.bf16.xpose.msra.mxu0 0
    %244 = vmatpush.bf16.xpose.msra.mxu0 0
    %245 = vmatpush.bf16.xpose.msra.mxu0 0
    %246 = vmatpush.bf16.xpose.msra.mxu0 0
    %247 = vmatpush.bf16.xpose.msra.mxu0 0
    %248 = vmatpush.bf16.xpose.msra.mxu0 %v239
    %249 = vmatmul.bf16.gmra.mxu0 %v233
    %v250 = vpop.f32.mrf.mxu0
    %v251 = vadd.f32 0.0, %v250
    %v252 = vpop.f32.mrf.mxu0
    %v253 = vadd.f32 0.0, %v252
    %254 = vmatmul.bf16.gmra.mxu0 %v236
    %v255 = vpop.f32.mrf.mxu0
    %v256 = vadd.f32 0.0, %v255
    %v257 = vpop.f32.mrf.mxu0
    %v258 = vadd.f32 0.0, %v257
    %259 = vdwg.mxu0
    %v264 = vunpack.c.l.b16 %v123
    %v265 = vunpack.c.l.b16 %v124
    %v266 = vunpack.c.l.b16 %v125
    %v267 = vunpack.c.l.b16 %v126
    %v268 = vpack.c.b16 %v265, %v264
    %v269 = vpack.c.b16 %v267, %v266
    %v271 = vunpack.c.l.b16 %v130
    %v272 = vpack.c.b16 %v271, %v271
    %273 = vrot.lane.b32.xlu0 %v272, 96
    %v274 = vpop.permute.xlu0 %273
    %v276 = vsel %vm57, %v268, 0
    %v279 = vsel %vm57, %v269, 0
    %v282 = vsel %vm57, %v274, 0
    %284 = vmatpush.bf16.xpose.msra.mxu0 0
    %285 = vmatpush.bf16.xpose.msra.mxu0 0
    %286 = vmatpush.bf16.xpose.msra.mxu0 0
    %287 = vmatpush.bf16.xpose.msra.mxu0 0
    %288 = vmatpush.bf16.xpose.msra.mxu0 0
    %289 = vmatpush.bf16.xpose.msra.mxu0 0
    %290 = vmatpush.bf16.xpose.msra.mxu0 0
    %291 = vmatpush.bf16.xpose.msra.mxu0 %v282
    %292 = vmatmul.bf16.gmra.mxu0 %v276
    %v293 = vpop.f32.mrf.mxu0
    %v294 = vadd.f32 0.0, %v293
    %v295 = vpop.f32.mrf.mxu0
    %v296 = vadd.f32 0.0, %v295
    %297 = vmatmul.bf16.gmra.mxu0 %v279
    %v298 = vpop.f32.mrf.mxu0
    %v299 = vadd.f32 0.0, %v298
    %v300 = vpop.f32.mrf.mxu0
    %v301 = vadd.f32 0.0, %v300
    %302 = vdwg.mxu0
    %v303 = vmul.f32 %v165, 0.35355338
    %v304 = vmul.f32 %v167, 0.35355338
    %v305 = vmul.f32 %v170, 0.35355338
    %v306 = vmul.f32 %v172, 0.35355338
    %v307 = vmul.f32 %v208, 0.35355338
    %v308 = vmul.f32 %v210, 0.35355338
    %v309 = vmul.f32 %v213, 0.35355338
    %v310 = vmul.f32 %v215, 0.35355338
    %v311 = vmul.f32 %v251, 0.35355338
    %v312 = vmul.f32 %v253, 0.35355338
    %v313 = vmul.f32 %v256, 0.35355338
    %v314 = vmul.f32 %v258, 0.35355338
    %v315 = vmul.f32 %v294, 0.35355338
    %v316 = vmul.f32 %v296, 0.35355338
    %v317 = vmul.f32 %v299, 0.35355338
    %v318 = vmul.f32 %v301, 0.35355338
    %v319 = vsub.f32 %v35, 1.0
    %v320 = vmul.f32 %v319, 1e+09
    %v322 = vrot.slane %v320, 1
    %v323 = vrot.slane %v320, 2
    %v324 = vrot.slane %v320, 3
    %v325 = vperm.slane %v320, 0
    %v326 = vperm.slane %v322, 0
    %v327 = vperm.slane %v323, 0
    %v328 = vperm.slane %v324, 0
    %v333 = vadd.f32 %v303, %v325
    %v334 = vadd.f32 %v304, %v325
    %v335 = vadd.f32 %v305, %v325
    %v336 = vadd.f32 %v306, %v325
    %v337 = vadd.f32 %v307, %v326
    %v338 = vadd.f32 %v308, %v326
    %v339 = vadd.f32 %v309, %v326
    %v340 = vadd.f32 %v310, %v326
    %v341 = vadd.f32 %v311, %v327
    %v342 = vadd.f32 %v312, %v327
    %v343 = vadd.f32 %v313, %v327
    %v344 = vadd.f32 %v314, %v327
    %v345 = vadd.f32 %v315, %v328
    %v346 = vadd.f32 %v316, %v328
    %v347 = vadd.f32 %v317, %v328
    %v348 = vadd.f32 %v318, %v328
    %vm349 = vcmask 64512
    %v350 = vsel %vm349, %v333, -inf
    %351 = vmax.xlane.f32.xlu0 %v350
    %v352 = vpop.xlane.xlu0 %351
    %v353 = vsel %vm349, %v334, -inf
    %354 = vmax.xlane.f32.xlu0 %v353
    %v355 = vpop.xlane.xlu0 %354
    %v356 = vsel %vm349, %v335, -inf
    %357 = vmax.xlane.f32.xlu0 %v356
    %v358 = vpop.xlane.xlu0 %357
    %v359 = vsel %vm349, %v336, -inf
    %360 = vmax.xlane.f32.xlu0 %v359
    %v361 = vpop.xlane.xlu0 %360
    %v362 = vsel %vm349, %v337, -inf
    %363 = vmax.xlane.f32.xlu0 %v362
    %v364 = vpop.xlane.xlu0 %363
    %v365 = vsel %vm349, %v338, -inf
    %366 = vmax.xlane.f32.xlu0 %v365
    %v367 = vpop.xlane.xlu0 %366
    %v368 = vsel %vm349, %v339, -inf
    %369 = vmax.xlane.f32.xlu0 %v368
    %v370 = vpop.xlane.xlu0 %369
    %v371 = vsel %vm349, %v340, -inf
    %372 = vmax.xlane.f32.xlu0 %v371
    %v373 = vpop.xlane.xlu0 %372
    %v374 = vsel %vm349, %v341, -inf
    %375 = vmax.xlane.f32.xlu0 %v374
    %v376 = vpop.xlane.xlu0 %375
    %v377 = vsel %vm349, %v342, -inf
    %378 = vmax.xlane.f32.xlu0 %v377
    %v379 = vpop.xlane.xlu0 %378
    %v380 = vsel %vm349, %v343, -inf
    %381 = vmax.xlane.f32.xlu0 %v380
    %v382 = vpop.xlane.xlu0 %381
    %v383 = vsel %vm349, %v344, -inf
    %384 = vmax.xlane.f32.xlu0 %v383
    %v385 = vpop.xlane.xlu0 %384
    %v386 = vsel %vm349, %v345, -inf
    %387 = vmax.xlane.f32.xlu0 %v386
    %v388 = vpop.xlane.xlu0 %387
    %v389 = vsel %vm349, %v346, -inf
    %390 = vmax.xlane.f32.xlu0 %v389
    %v391 = vpop.xlane.xlu0 %390
    %v392 = vsel %vm349, %v347, -inf
    %393 = vmax.xlane.f32.xlu0 %v392
    %v394 = vpop.xlane.xlu0 %393
    %v395 = vsel %vm349, %v348, -inf
    %396 = vmax.xlane.f32.xlu0 %v395
    %v397 = vpop.xlane.xlu0 %396
    %v398 = vsub.f32 %v333, %v352
    %v399 = vsub.f32 %v334, %v355
    %v400 = vsub.f32 %v335, %v358
    %v401 = vsub.f32 %v336, %v361
    %v402 = vsub.f32 %v337, %v364
    %v403 = vsub.f32 %v338, %v367
    %v404 = vsub.f32 %v339, %v370
    %v405 = vsub.f32 %v340, %v373
    %v406 = vsub.f32 %v341, %v376
    %v407 = vsub.f32 %v342, %v379
    %v408 = vsub.f32 %v343, %v382
    %v409 = vsub.f32 %v344, %v385
    %v410 = vsub.f32 %v345, %v388
    %v411 = vsub.f32 %v346, %v391
    %v412 = vsub.f32 %v347, %v394
    %v413 = vsub.f32 %v348, %v397
    %v414 = vmul.f32 %v398, 1.442695
    %v415 = vpow.pop %v414
    %v416 = vmul.f32 %v399, 1.442695
    %v417 = vpow.pop %v416
    %v418 = vmul.f32 %v400, 1.442695
    %v419 = vpow.pop %v418
    %v420 = vmul.f32 %v401, 1.442695
    %v421 = vpow.pop %v420
    %v422 = vmul.f32 %v402, 1.442695
    %v423 = vpow.pop %v422
    %v424 = vmul.f32 %v403, 1.442695
    %v425 = vpow.pop %v424
    %v426 = vmul.f32 %v404, 1.442695
    %v427 = vpow.pop %v426
    %v428 = vmul.f32 %v405, 1.442695
    %v429 = vpow.pop %v428
    %v430 = vmul.f32 %v406, 1.442695
    %v431 = vpow.pop %v430
    %v432 = vmul.f32 %v407, 1.442695
    %v433 = vpow.pop %v432
    %v434 = vmul.f32 %v408, 1.442695
    %v435 = vpow.pop %v434
    %v436 = vmul.f32 %v409, 1.442695
    %v437 = vpow.pop %v436
    %v438 = vmul.f32 %v410, 1.442695
    %v439 = vpow.pop %v438
    %v440 = vmul.f32 %v411, 1.442695
    %v441 = vpow.pop %v440
    %v442 = vmul.f32 %v412, 1.442695
    %v443 = vpow.pop %v442
    %v444 = vmul.f32 %v413, 1.442695
    %v445 = vpow.pop %v444
    %v446 = vsel %vm349, %v415, 0.0
    %447 = vadd.xlane.f32.xlu0 %v446
    %v448 = vpop.xlane.xlu0 %447
    %v449 = vsel %vm349, %v417, 0.0
    %450 = vadd.xlane.f32.xlu0 %v449
    %v451 = vpop.xlane.xlu0 %450
    %v452 = vsel %vm349, %v419, 0.0
    %453 = vadd.xlane.f32.xlu0 %v452
    %v454 = vpop.xlane.xlu0 %453
    %v455 = vsel %vm349, %v421, 0.0
    %456 = vadd.xlane.f32.xlu0 %v455
    %v457 = vpop.xlane.xlu0 %456
    %v458 = vsel %vm349, %v423, 0.0
    %459 = vadd.xlane.f32.xlu0 %v458
    %v460 = vpop.xlane.xlu0 %459
    %v461 = vsel %vm349, %v425, 0.0
    %462 = vadd.xlane.f32.xlu0 %v461
    %v463 = vpop.xlane.xlu0 %462
    %v464 = vsel %vm349, %v427, 0.0
    %465 = vadd.xlane.f32.xlu0 %v464
    %v466 = vpop.xlane.xlu0 %465
    %v467 = vsel %vm349, %v429, 0.0
    %468 = vadd.xlane.f32.xlu0 %v467
    %v469 = vpop.xlane.xlu0 %468
    %v470 = vsel %vm349, %v431, 0.0
    %471 = vadd.xlane.f32.xlu0 %v470
    %v472 = vpop.xlane.xlu0 %471
    %v473 = vsel %vm349, %v433, 0.0
    %474 = vadd.xlane.f32.xlu0 %v473
    %v475 = vpop.xlane.xlu0 %474
    %v476 = vsel %vm349, %v435, 0.0
    %477 = vadd.xlane.f32.xlu0 %v476
    %v478 = vpop.xlane.xlu0 %477
    %v479 = vsel %vm349, %v437, 0.0
    %480 = vadd.xlane.f32.xlu0 %v479
    %v481 = vpop.xlane.xlu0 %480
    %v482 = vsel %vm349, %v439, 0.0
    %483 = vadd.xlane.f32.xlu0 %v482
    %v484 = vpop.xlane.xlu0 %483
    %v485 = vsel %vm349, %v441, 0.0
    %486 = vadd.xlane.f32.xlu0 %v485
    %v487 = vpop.xlane.xlu0 %486
    %v488 = vsel %vm349, %v443, 0.0
    %489 = vadd.xlane.f32.xlu0 %v488
    %v490 = vpop.xlane.xlu0 %489
    %v491 = vsel %vm349, %v445, 0.0
    %492 = vadd.xlane.f32.xlu0 %v491
    %v493 = vpop.xlane.xlu0 %492
    %v494 = vrcp.pop %v448
    %v495 = vrcp.pop %v451
    %v496 = vrcp.pop %v454
    %v497 = vrcp.pop %v457
    %v498 = vrcp.pop %v460
    %v499 = vrcp.pop %v463
    %v500 = vrcp.pop %v466
    %v501 = vrcp.pop %v469
    %v502 = vrcp.pop %v472
    %v503 = vrcp.pop %v475
    %v504 = vrcp.pop %v478
    %v505 = vrcp.pop %v481
    %v506 = vrcp.pop %v484
    %v507 = vrcp.pop %v487
    %v508 = vrcp.pop %v490
    %v509 = vrcp.pop %v493
    %v510 = vmul.f32 %v415, %v494
    %v511 = vmul.f32 %v417, %v495
    %v512 = vmul.f32 %v419, %v496
    %v513 = vmul.f32 %v421, %v497
    %v514 = vmul.f32 %v423, %v498
    %v515 = vmul.f32 %v425, %v499
    %v516 = vmul.f32 %v427, %v500
    %v517 = vmul.f32 %v429, %v501
    %v518 = vmul.f32 %v431, %v502
    %v519 = vmul.f32 %v433, %v503
    %v520 = vmul.f32 %v435, %v504
    %v521 = vmul.f32 %v437, %v505
    %v522 = vmul.f32 %v439, %v506
    %v523 = vmul.f32 %v441, %v507
    %v524 = vmul.f32 %v443, %v508
    %v525 = vmul.f32 %v445, %v509
    %v526 = vpack.c.bf16 %v510, %v510
    %v527 = vpack.c.bf16 %v511, %v511
    %v528 = vpack.c.bf16 %v512, %v512
    %v529 = vpack.c.bf16 %v513, %v513
    %v530 = vpack.c.bf16 %v514, %v514
    %v531 = vpack.c.bf16 %v515, %v515
    %v532 = vpack.c.bf16 %v516, %v516
    %v533 = vpack.c.bf16 %v517, %v517
    %v534 = vpack.c.bf16 %v518, %v518
    %v535 = vpack.c.bf16 %v519, %v519
    %v536 = vpack.c.bf16 %v520, %v520
    %v537 = vpack.c.bf16 %v521, %v521
    %v538 = vpack.c.bf16 %v522, %v522
    %v539 = vpack.c.bf16 %v523, %v523
    %v540 = vpack.c.bf16 %v524, %v524
    %v541 = vpack.c.bf16 %v525, %v525
    %v546 = vunpack.c.l.b16 %v526
    %v547 = vunpack.c.l.b16 %v527
    %v548 = vunpack.c.l.b16 %v528
    %v549 = vunpack.c.l.b16 %v529
    %v550 = vpack.c.b16 %v547, %v546
    %v551 = vpack.c.b16 %v549, %v548
    %552 = vrot.lane.b32.xlu0 %v143, 64
    %v553 = vpop.permute.xlu0 %552
    %v555 = vsel %vm349, %v550, 0
    %v558 = vsel %vm349, %v551, 0
    %vm560 = vcmask 1043456
    %v562 = vsel %vm560, %v553, 0
    %564 = vmatpush.bf16.msra.mxu0 0
    %565 = vmatpush.bf16.msra.mxu0 0
    %566 = vmatpush.bf16.msra.mxu0 0
    %567 = vmatpush.bf16.msra.mxu0 0
    %568 = vmatpush.bf16.msra.mxu0 0
    %569 = vmatpush.bf16.msra.mxu0 0
    %570 = vmatpush.bf16.msra.mxu0 0
    %571 = vmatpush.bf16.msra.mxu0 %v562
    %572 = vmatmul.bf16.gmra.mxu0 %v555
    %v573 = vpop.f32.mrf.mxu0
    %v574 = vadd.f32 0.0, %v573
    %v575 = vpop.f32.mrf.mxu0
    %v576 = vadd.f32 0.0, %v575
    %577 = vmatmul.bf16.gmra.mxu0 %v558
    %v578 = vpop.f32.mrf.mxu0
    %v579 = vadd.f32 0.0, %v578
    %v580 = vpop.f32.mrf.mxu0
    %v581 = vadd.f32 0.0, %v580
    %582 = vdwg.mxu0
    %v587 = vunpack.c.l.b16 %v530
    %v588 = vunpack.c.l.b16 %v531
    %v589 = vunpack.c.l.b16 %v532
    %v590 = vunpack.c.l.b16 %v533
    %v591 = vpack.c.b16 %v588, %v587
    %v592 = vpack.c.b16 %v590, %v589
    %593 = vrot.lane.b32.xlu0 %v186, 64
    %v594 = vpop.permute.xlu0 %593
    %v596 = vsel %vm349, %v591, 0
    %v599 = vsel %vm349, %v592, 0
    %v602 = vsel %vm560, %v594, 0
    %604 = vmatpush.bf16.msra.mxu0 0
    %605 = vmatpush.bf16.msra.mxu0 0
    %606 = vmatpush.bf16.msra.mxu0 0
    %607 = vmatpush.bf16.msra.mxu0 0
    %608 = vmatpush.bf16.msra.mxu0 0
    %609 = vmatpush.bf16.msra.mxu0 0
    %610 = vmatpush.bf16.msra.mxu0 0
    %611 = vmatpush.bf16.msra.mxu0 %v602
    %612 = vmatmul.bf16.gmra.mxu0 %v596
    %v613 = vpop.f32.mrf.mxu0
    %v614 = vadd.f32 0.0, %v613
    %v615 = vpop.f32.mrf.mxu0
    %v616 = vadd.f32 0.0, %v615
    %617 = vmatmul.bf16.gmra.mxu0 %v599
    %v618 = vpop.f32.mrf.mxu0
    %v619 = vadd.f32 0.0, %v618
    %v620 = vpop.f32.mrf.mxu0
    %v621 = vadd.f32 0.0, %v620
    %622 = vdwg.mxu0
    %v627 = vunpack.c.l.b16 %v534
    %v628 = vunpack.c.l.b16 %v535
    %v629 = vunpack.c.l.b16 %v536
    %v630 = vunpack.c.l.b16 %v537
    %v631 = vpack.c.b16 %v628, %v627
    %v632 = vpack.c.b16 %v630, %v629
    %633 = vrot.lane.b32.xlu0 %v229, 64
    %v634 = vpop.permute.xlu0 %633
    %v636 = vsel %vm349, %v631, 0
    %v639 = vsel %vm349, %v632, 0
    %v642 = vsel %vm560, %v634, 0
    %644 = vmatpush.bf16.msra.mxu0 0
    %645 = vmatpush.bf16.msra.mxu0 0
    %646 = vmatpush.bf16.msra.mxu0 0
    %647 = vmatpush.bf16.msra.mxu0 0
    %648 = vmatpush.bf16.msra.mxu0 0
    %649 = vmatpush.bf16.msra.mxu0 0
    %650 = vmatpush.bf16.msra.mxu0 0
    %651 = vmatpush.bf16.msra.mxu0 %v642
    %652 = vmatmul.bf16.gmra.mxu0 %v636
    %v653 = vpop.f32.mrf.mxu0
    %v654 = vadd.f32 0.0, %v653
    %v655 = vpop.f32.mrf.mxu0
    %v656 = vadd.f32 0.0, %v655
    %657 = vmatmul.bf16.gmra.mxu0 %v639
    %v658 = vpop.f32.mrf.mxu0
    %v659 = vadd.f32 0.0, %v658
    %v660 = vpop.f32.mrf.mxu0
    %v661 = vadd.f32 0.0, %v660
    %662 = vdwg.mxu0
    %v667 = vunpack.c.l.b16 %v538
    %v668 = vunpack.c.l.b16 %v539
    %v669 = vunpack.c.l.b16 %v540
    %v670 = vunpack.c.l.b16 %v541
    %v671 = vpack.c.b16 %v668, %v667
    %v672 = vpack.c.b16 %v670, %v669
    %673 = vrot.lane.b32.xlu0 %v272, 64
    %v674 = vpop.permute.xlu0 %673
    %v676 = vsel %vm349, %v671, 0
    %v679 = vsel %vm349, %v672, 0
    %v682 = vsel %vm560, %v674, 0
    %684 = vmatpush.bf16.msra.mxu0 0
    %685 = vmatpush.bf16.msra.mxu0 0
    %686 = vmatpush.bf16.msra.mxu0 0
    %687 = vmatpush.bf16.msra.mxu0 0
    %688 = vmatpush.bf16.msra.mxu0 0
    %689 = vmatpush.bf16.msra.mxu0 0
    %690 = vmatpush.bf16.msra.mxu0 0
    %691 = vmatpush.bf16.msra.mxu0 %v682
    %692 = vmatmul.bf16.gmra.mxu0 %v676
    %v693 = vpop.f32.mrf.mxu0
    %v694 = vadd.f32 0.0, %v693
    %v695 = vpop.f32.mrf.mxu0
    %v696 = vadd.f32 0.0, %v695
    %697 = vmatmul.bf16.gmra.mxu0 %v679
    %v698 = vpop.f32.mrf.mxu0
    %v699 = vadd.f32 0.0, %v698
    %v700 = vpop.f32.mrf.mxu0
    %v701 = vadd.f32 0.0, %v700
    %702 = vdwg.mxu0
    %v703 = vperm.slane %v37, 0
    %v704 = vmul.f32 %v574, %v703
    %v705 = vmul.f32 %v614, %v703
    %v706 = vmul.f32 %v654, %v703
    %v707 = vmul.f32 %v694, %v703
    %v708 = vperm.slane %v37, 1
    %v709 = vmul.f32 %v576, %v708
    %v710 = vmul.f32 %v616, %v708
    %v711 = vmul.f32 %v656, %v708
    %v712 = vmul.f32 %v696, %v708
    %v713 = vadd.f32 %v704, %v709
    %v714 = vadd.f32 %v705, %v710
    %v715 = vadd.f32 %v706, %v711
    %v716 = vadd.f32 %v707, %v712
    %v717 = vperm.slane %v37, 2
    %v718 = vmul.f32 %v579, %v717
    %v719 = vmul.f32 %v619, %v717
    %v720 = vmul.f32 %v659, %v717
    %v721 = vmul.f32 %v699, %v717
    %v722 = vadd.f32 %v713, %v718
    %v723 = vadd.f32 %v714, %v719
    %v724 = vadd.f32 %v715, %v720
    %v725 = vadd.f32 %v716, %v721
    %v726 = vperm.slane %v37, 3
    %v727 = vmul.f32 %v581, %v726
    %v728 = vmul.f32 %v621, %v726
    %v729 = vmul.f32 %v661, %v726
    %v730 = vmul.f32 %v701, %v726
    %v731 = vadd.f32 %v722, %v727
    %v732 = vadd.f32 %v723, %v728
    %v733 = vadd.f32 %v724, %v729
    %v734 = vadd.f32 %v725, %v730
    %v735 = vpack.c.bf16 %v732, %v731
    %v736 = vpack.c.bf16 %v734, %v733
    %v737 = vld [vmem:[%s3] sm:$0xf]
    %v738 = vld [vmem:[%s3 + $0x4] sm:$0xf]
    %v739 = vld [vmem:[%s3 + $0x8] sm:$0xf]
    %v740 = vld [vmem:[%s3 + $0xc] sm:$0xf]
    %v741 = vperm.slane %v36, 1
    %v746 = vunpack.c.l.b16 %v737
    %v747 = vunpack.c.l.b16 %v738
    %v748 = vunpack.c.l.b16 %v739
    %v749 = vunpack.c.l.b16 %v740
    %v750 = vpack.c.b16 %v747, %v746
    %v751 = vpack.c.b16 %v749, %v748
    %v755 = vsel %vm57, %v735, 0
    %v758 = vsel %vm57, %v736, 0
    %760 = vmatpush.bf16.msra.mxu0 0
    %761 = vmatpush.bf16.msra.mxu0 0
    %762 = vmatpush.bf16.msra.mxu0 0
    %763 = vmatpush.bf16.msra.mxu0 0
    %764 = vmatpush.bf16.msra.mxu0 0
    %765 = vmatpush.bf16.msra.mxu0 0
    %766 = vmatpush.bf16.msra.mxu0 %v751
    %767 = vmatpush.bf16.msra.mxu0 %v750
    %768 = vmatmul.bf16.gmra.mxu0 %v755
    %v769 = vpop.f32.mrf.mxu0
    %v770 = vadd.f32 %v741, %v769
    %v771 = vpop.f32.mrf.mxu0
    %v772 = vadd.f32 %v741, %v771
    %773 = vmatmul.bf16.gmra.mxu0 %v758
    %v774 = vpop.f32.mrf.mxu0
    %v775 = vadd.f32 %v741, %v774
    %v776 = vpop.f32.mrf.mxu0
    %v777 = vadd.f32 %v741, %v776
    %778 = vdwg.mxu0
    %v779 = vadd.f32 %v31, %v770
    %v780 = vadd.f32 %v32, %v772
    %v781 = vadd.f32 %v33, %v775
    %v782 = vadd.f32 %v34, %v777
    %v783 = vsel %vm57, %v779, 0.0
    %784 = vadd.xlane.f32.xlu0 %v783
    %v785 = vpop.xlane.xlu0 %784
    %v786 = vsel %vm57, %v780, 0.0
    %787 = vadd.xlane.f32.xlu0 %v786
    %v788 = vpop.xlane.xlu0 %787
    %v789 = vsel %vm57, %v781, 0.0
    %790 = vadd.xlane.f32.xlu0 %v789
    %v791 = vpop.xlane.xlu0 %790
    %v792 = vsel %vm57, %v782, 0.0
    %793 = vadd.xlane.f32.xlu0 %v792
    %v794 = vpop.xlane.xlu0 %793
    %v795 = vrcp.pop 32.0
    %v796 = vmul.f32 32.0, %v795
    %v797 = vsub.f32 1.0, %v796
    %v798 = vmul.f32 %v795, %v797
    %v799 = vadd.f32 %v795, %v798
    %vm800 = vweird.f32 %v795
    %v801 = vsel %vm800, %v795, %v799
    %v802 = vmul.f32 %v785, %v801
    %v803 = vmul.f32 %v788, %v801
    %v804 = vmul.f32 %v791, %v801
    %v805 = vmul.f32 %v794, %v801
    %v806 = vsub.f32 %v779, %v802
    %v807 = vsub.f32 %v780, %v803
    %v808 = vsub.f32 %v781, %v804
    %v809 = vsub.f32 %v782, %v805
    %v810 = vmul.f32 %v806, %v806
    %v811 = vmul.f32 %v807, %v807
    %v812 = vmul.f32 %v808, %v808
    %v813 = vmul.f32 %v809, %v809
    %v814 = vsel %vm57, %v810, 0.0
    %815 = vadd.xlane.f32.xlu0 %v814
    %v816 = vpop.xlane.xlu0 %815
    %v817 = vsel %vm57, %v811, 0.0
    %818 = vadd.xlane.f32.xlu0 %v817
    %v819 = vpop.xlane.xlu0 %818
    %v820 = vsel %vm57, %v812, 0.0
    %821 = vadd.xlane.f32.xlu0 %v820
    %v822 = vpop.xlane.xlu0 %821
    %v823 = vsel %vm57, %v813, 0.0
    %824 = vadd.xlane.f32.xlu0 %v823
    %v825 = vpop.xlane.xlu0 %824
    %v826 = vmul.f32 %v816, %v801
    %v827 = vmul.f32 %v819, %v801
    %v828 = vmul.f32 %v822, %v801
    %v829 = vmul.f32 %v825, %v801
    %v830 = vadd.f32 %v826, 1e-05
    %v831 = vadd.f32 %v827, 1e-05
    %v832 = vadd.f32 %v828, 1e-05
    %v833 = vadd.f32 %v829, 1e-05
    %v834 = vrsqrt.pop %v830
    %v835 = vmul.f32 %v834, %v830
    %v836 = vmul.f32 %v835, %v834
    %v837 = vmul.f32 0.5, %v836
    %v838 = vsub.f32 1.5, %v837
    %v839 = vmul.f32 %v834, %v838
    %vm840 = vweird.f32 %v830
    %vm841 = vweird.f32 %v834
    %vm842 = vmor %vm840, %vm841
    %v843 = vsel %vm842, %v834, %v839
    %v844 = vrsqrt.pop %v831
    %v845 = vmul.f32 %v844, %v831
    %v846 = vmul.f32 %v845, %v844
    %v847 = vmul.f32 0.5, %v846
    %v848 = vsub.f32 1.5, %v847
    %v849 = vmul.f32 %v844, %v848
    %vm850 = vweird.f32 %v831
    %vm851 = vweird.f32 %v844
    %vm852 = vmor %vm850, %vm851
    %v853 = vsel %vm852, %v844, %v849
    %v854 = vrsqrt.pop %v832
    %v855 = vmul.f32 %v854, %v832
    %v856 = vmul.f32 %v855, %v854
    %v857 = vmul.f32 0.5, %v856
    %v858 = vsub.f32 1.5, %v857
    %v859 = vmul.f32 %v854, %v858
    %vm860 = vweird.f32 %v832
    %vm861 = vweird.f32 %v854
    %vm862 = vmor %vm860, %vm861
    %v863 = vsel %vm862, %v854, %v859
    %v864 = vrsqrt.pop %v833
    %v865 = vmul.f32 %v864, %v833
    %v866 = vmul.f32 %v865, %v864
    %v867 = vmul.f32 0.5, %v866
    %v868 = vsub.f32 1.5, %v867
    %v869 = vmul.f32 %v864, %v868
    %vm870 = vweird.f32 %v833
    %vm871 = vweird.f32 %v864
    %vm872 = vmor %vm870, %vm871
    %v873 = vsel %vm872, %v864, %v869
    %v874 = vmul.f32 %v806, %v843
    %v875 = vmul.f32 %v807, %v853
    %v876 = vmul.f32 %v808, %v863
    %v877 = vmul.f32 %v809, %v873
    %v878 = vperm.slane %v36, 2
    %v879 = vmul.f32 %v874, %v878
    %v880 = vmul.f32 %v875, %v878
    %v881 = vmul.f32 %v876, %v878
    %v882 = vmul.f32 %v877, %v878
    %v883 = vperm.slane %v36, 3
    %v884 = vadd.f32 %v879, %v883
    %v885 = vadd.f32 %v880, %v883
    %v886 = vadd.f32 %v881, %v883
    %v887 = vadd.f32 %v882, %v883
    %v888 = vpack.c.bf16 %v885, %v884
    %v889 = vpack.c.bf16 %v887, %v886
    %v890 = vld [vmem:[%s4] sm:$0xf]
    %v891 = vld [vmem:[%s4 + $0x4] sm:$0xf]
    %v892 = vld [vmem:[%s4 + $0x8] sm:$0xf]
    %v893 = vld [vmem:[%s4 + $0xc] sm:$0xf]
    %v894 = vperm.slane %v36, 4
    %v899 = vunpack.c.l.b16 %v890
    %v900 = vunpack.c.l.b16 %v891
    %v901 = vunpack.c.l.b16 %v892
    %v902 = vunpack.c.l.b16 %v893
    %v903 = vpack.c.b16 %v900, %v899
    %v904 = vpack.c.b16 %v902, %v901
    %v908 = vsel %vm57, %v888, 0
    %v911 = vsel %vm57, %v889, 0
    %913 = vmatpush.bf16.msra.mxu0 0
    %914 = vmatpush.bf16.msra.mxu0 0
    %915 = vmatpush.bf16.msra.mxu0 0
    %916 = vmatpush.bf16.msra.mxu0 0
    %917 = vmatpush.bf16.msra.mxu0 0
    %918 = vmatpush.bf16.msra.mxu0 0
    %919 = vmatpush.bf16.msra.mxu0 %v904
    %920 = vmatpush.bf16.msra.mxu0 %v903
    %921 = vmatmul.bf16.gmra.mxu0 %v908
    %v922 = vpop.f32.mrf.mxu0
    %v923 = vadd.f32 %v894, %v922
    %v924 = vpop.f32.mrf.mxu0
    %v925 = vadd.f32 %v894, %v924
    %926 = vmatmul.bf16.gmra.mxu0 %v911
    %v927 = vpop.f32.mrf.mxu0
    %v928 = vadd.f32 %v894, %v927
    %v929 = vpop.f32.mrf.mxu0
    %v930 = vadd.f32 %v894, %v929
    %931 = vdwg.mxu0
    %v932 = vmul.f32 %v923, %v923
    %v933 = vmul.f32 %v925, %v925
    %v934 = vmul.f32 %v928, %v928
    %v935 = vmul.f32 %v930, %v930
    %v936 = vmul.f32 %v923, %v932
    %v937 = vmul.f32 %v925, %v933
    %v938 = vmul.f32 %v928, %v934
    %v939 = vmul.f32 %v930, %v935
    %v940 = vmul.f32 %v936, 0.044715
    %v941 = vmul.f32 %v937, 0.044715
    %v942 = vmul.f32 %v938, 0.044715
    %v943 = vmul.f32 %v939, 0.044715
    %v944 = vadd.f32 %v923, %v940
    %v945 = vadd.f32 %v925, %v941
    %v946 = vadd.f32 %v928, %v942
    %v947 = vadd.f32 %v930, %v943
    %v948 = vmul.f32 %v944, 0.7978846
    %v949 = vmul.f32 %v945, 0.7978846
    %v950 = vmul.f32 %v946, 0.7978846
    %v951 = vmul.f32 %v947, 0.7978846
    %v952 = vtanh.pop %v948
    %v953 = vtanh.pop %v949
    %v954 = vtanh.pop %v950
    %v955 = vtanh.pop %v951
    %v956 = vadd.f32 %v952, 1.0
    %v957 = vadd.f32 %v953, 1.0
    %v958 = vadd.f32 %v954, 1.0
    %v959 = vadd.f32 %v955, 1.0
    %v960 = vmul.f32 %v956, 0.5
    %v961 = vmul.f32 %v957, 0.5
    %v962 = vmul.f32 %v958, 0.5
    %v963 = vmul.f32 %v959, 0.5
    %v964 = vmul.f32 %v923, %v960
    %v965 = vmul.f32 %v925, %v961
    %v966 = vmul.f32 %v928, %v962
    %v967 = vmul.f32 %v930, %v963
    %v968 = vpack.c.bf16 %v965, %v964
    %v969 = vpack.c.bf16 %v967, %v966
    %v970 = vld [vmem:[%s5] sm:$0xf]
    %v971 = vld [vmem:[%s5 + $0x4] sm:$0xf]
    %v972 = vld [vmem:[%s5 + $0x8] sm:$0xf]
    %v973 = vld [vmem:[%s5 + $0xc] sm:$0xf]
    %v974 = vld [vmem:[%s5 + $0x10] sm:$0xf]
    %v975 = vld [vmem:[%s5 + $0x14] sm:$0xf]
    %v976 = vld [vmem:[%s5 + $0x18] sm:$0xf]
    %v977 = vld [vmem:[%s5 + $0x1c] sm:$0xf]
    %v978 = vperm.slane %v36, 5
    %v987 = vunpack.c.l.b16 %v970
    %v988 = vunpack.c.l.b16 %v971
    %v989 = vunpack.c.l.b16 %v972
    %v990 = vunpack.c.l.b16 %v973
    %v991 = vunpack.c.l.b16 %v974
    %v992 = vunpack.c.l.b16 %v975
    %v993 = vunpack.c.l.b16 %v976
    %v994 = vunpack.c.l.b16 %v977
    %v995 = vpack.c.b16 %v988, %v987
    %v996 = vpack.c.b16 %v990, %v989
    %v997 = vpack.c.b16 %v992, %v991
    %v998 = vpack.c.b16 %v994, %v993
    %vm1003 = vcmask 523264
    %v1005 = vsel %vm1003, %v968, 0
    %v1008 = vsel %vm1003, %v969, 0
    %1010 = vmatpush.bf16.msra.mxu0 0
    %1011 = vmatpush.bf16.msra.mxu0 0
    %1012 = vmatpush.bf16.msra.mxu0 0
    %1013 = vmatpush.bf16.msra.mxu0 0
    %1014 = vmatpush.bf16.msra.mxu0 %v998
    %1015 = vmatpush.bf16.msra.mxu0 %v997
    %1016 = vmatpush.bf16.msra.mxu0 %v996
    %1017 = vmatpush.bf16.msra.mxu0 %v995
    %1018 = vmatmul.bf16.gmra.mxu0 %v1005
    %v1019 = vpop.f32.mrf.mxu0
    %v1020 = vadd.f32 %v978, %v1019
    %v1021 = vpop.f32.mrf.mxu0
    %v1022 = vadd.f32 %v978, %v1021
    %1023 = vmatmul.bf16.gmra.mxu0 %v1008
    %v1024 = vpop.f32.mrf.mxu0
    %v1025 = vadd.f32 %v978, %v1024
    %v1026 = vpop.f32.mrf.mxu0
    %v1027 = vadd.f32 %v978, %v1026
    %1028 = vdwg.mxu0
    %v1029 = vadd.f32 %v884, %v1020
    %v1030 = vadd.f32 %v885, %v1022
    %v1031 = vadd.f32 %v886, %v1025
    %v1032 = vadd.f32 %v887, %v1027
    %v1033 = vsel %vm57, %v1029, 0.0
    %1034 = vadd.xlane.f32.xlu0 %v1033
    %v1035 = vpop.xlane.xlu0 %1034
    %v1036 = vsel %vm57, %v1030, 0.0
    %1037 = vadd.xlane.f32.xlu0 %v1036
    %v1038 = vpop.xlane.xlu0 %1037
    %v1039 = vsel %vm57, %v1031, 0.0
    %1040 = vadd.xlane.f32.xlu0 %v1039
    %v1041 = vpop.xlane.xlu0 %1040
    %v1042 = vsel %vm57, %v1032, 0.0
    %1043 = vadd.xlane.f32.xlu0 %v1042
    %v1044 = vpop.xlane.xlu0 %1043
    %v1045 = vmul.f32 %v1035, %v801
    %v1046 = vmul.f32 %v1038, %v801
    %v1047 = vmul.f32 %v1041, %v801
    %v1048 = vmul.f32 %v1044, %v801
    %v1049 = vsub.f32 %v1029, %v1045
    %v1050 = vsub.f32 %v1030, %v1046
    %v1051 = vsub.f32 %v1031, %v1047
    %v1052 = vsub.f32 %v1032, %v1048
    %v1053 = vmul.f32 %v1049, %v1049
    %v1054 = vmul.f32 %v1050, %v1050
    %v1055 = vmul.f32 %v1051, %v1051
    %v1056 = vmul.f32 %v1052, %v1052
    %v1057 = vsel %vm57, %v1053, 0.0
    %1058 = vadd.xlane.f32.xlu0 %v1057
    %v1059 = vpop.xlane.xlu0 %1058
    %v1060 = vsel %vm57, %v1054, 0.0
    %1061 = vadd.xlane.f32.xlu0 %v1060
    %v1062 = vpop.xlane.xlu0 %1061
    %v1063 = vsel %vm57, %v1055, 0.0
    %1064 = vadd.xlane.f32.xlu0 %v1063
    %v1065 = vpop.xlane.xlu0 %1064
    %v1066 = vsel %vm57, %v1056, 0.0
    %1067 = vadd.xlane.f32.xlu0 %v1066
    %v1068 = vpop.xlane.xlu0 %1067
    %v1069 = vmul.f32 %v1059, %v801
    %v1070 = vmul.f32 %v1062, %v801
    %v1071 = vmul.f32 %v1065, %v801
    %v1072 = vmul.f32 %v1068, %v801
    %v1073 = vadd.f32 %v1069, 1e-05
    %v1074 = vadd.f32 %v1070, 1e-05
    %v1075 = vadd.f32 %v1071, 1e-05
    %v1076 = vadd.f32 %v1072, 1e-05
    %v1077 = vrsqrt.pop %v1073
    %v1078 = vmul.f32 %v1077, %v1073
    %v1079 = vmul.f32 %v1078, %v1077
    %v1080 = vmul.f32 0.5, %v1079
    %v1081 = vsub.f32 1.5, %v1080
    %v1082 = vmul.f32 %v1077, %v1081
    %vm1083 = vweird.f32 %v1073
    %vm1084 = vweird.f32 %v1077
    %vm1085 = vmor %vm1083, %vm1084
    %v1086 = vsel %vm1085, %v1077, %v1082
    %v1087 = vrsqrt.pop %v1074
    %v1088 = vmul.f32 %v1087, %v1074
    %v1089 = vmul.f32 %v1088, %v1087
    %v1090 = vmul.f32 0.5, %v1089
    %v1091 = vsub.f32 1.5, %v1090
    %v1092 = vmul.f32 %v1087, %v1091
    %vm1093 = vweird.f32 %v1074
    %vm1094 = vweird.f32 %v1087
    %vm1095 = vmor %vm1093, %vm1094
    %v1096 = vsel %vm1095, %v1087, %v1092
    %v1097 = vrsqrt.pop %v1075
    %v1098 = vmul.f32 %v1097, %v1075
    %v1099 = vmul.f32 %v1098, %v1097
    %v1100 = vmul.f32 0.5, %v1099
    %v1101 = vsub.f32 1.5, %v1100
    %v1102 = vmul.f32 %v1097, %v1101
    %vm1103 = vweird.f32 %v1075
    %vm1104 = vweird.f32 %v1097
    %vm1105 = vmor %vm1103, %vm1104
    %v1106 = vsel %vm1105, %v1097, %v1102
    %v1107 = vrsqrt.pop %v1076
    %v1108 = vmul.f32 %v1107, %v1076
    %v1109 = vmul.f32 %v1108, %v1107
    %v1110 = vmul.f32 0.5, %v1109
    %v1111 = vsub.f32 1.5, %v1110
    %v1112 = vmul.f32 %v1107, %v1111
    %vm1113 = vweird.f32 %v1076
    %vm1114 = vweird.f32 %v1107
    %vm1115 = vmor %vm1113, %vm1114
    %v1116 = vsel %vm1115, %v1107, %v1112
    %v1117 = vmul.f32 %v1049, %v1086
    %v1118 = vmul.f32 %v1050, %v1096
    %v1119 = vmul.f32 %v1051, %v1106
    %v1120 = vmul.f32 %v1052, %v1116
    %v1121 = vperm.slane %v36, 6
    %v1122 = vmul.f32 %v1117, %v1121
    %v1123 = vmul.f32 %v1118, %v1121
    %v1124 = vmul.f32 %v1119, %v1121
    %v1125 = vmul.f32 %v1120, %v1121
    %v1126 = vperm.slane %v36, 7
    %v1127 = vadd.f32 %v1122, %v1126
    %v1128 = vadd.f32 %v1123, %v1126
    %v1129 = vadd.f32 %v1124, %v1126
    %v1130 = vadd.f32 %v1125, %v1126
    %v1131 = vperm.slane %v35, 0
    %v1132 = vlaneseq
    %v1133 = vshrl.u32 %v1132, 7
    %1135 = vset.pattern.permute.xlu0 %v1133
    %1136 = vperm.xlu0 %1135, %v1131
    %v1137 = vpop.permute.xlu0 %1136
    %v1138 = vperm.slane %v35, 1
    %v1139 = vlaneseq
    %v1140 = vshrl.u32 %v1139, 7
    %1142 = vset.pattern.permute.xlu0 %v1140
    %1143 = vperm.xlu0 %1142, %v1138
    %v1144 = vpop.permute.xlu0 %1143
    %v1145 = vperm.slane %v35, 2
    %v1146 = vlaneseq
    %v1147 = vshrl.u32 %v1146, 7
    %1149 = vset.pattern.permute.xlu0 %v1147
    %1150 = vperm.xlu0 %1149, %v1145
    %v1151 = vpop.permute.xlu0 %1150
    %v1152 = vperm.slane %v35, 3
    %v1153 = vlaneseq
    %v1154 = vshrl.u32 %v1153, 7
    %1156 = vset.pattern.permute.xlu0 %v1154
    %1157 = vperm.xlu0 %1156, %v1152
    %v1158 = vpop.permute.xlu0 %1157
    %v1159 = vmul.f32 %v1127, %v1137
    %v1160 = vmul.f32 %v1128, %v1144
    %v1161 = vmul.f32 %v1129, %v1151
    %v1162 = vmul.f32 %v1130, %v1158
    %v1163 = vsel %vm57, %v1159, 0.0
    %v1164 = vrot.slane %v1163, 4
    %v1165 = vadd.f32 %v1163, %v1164
    %v1166 = vrot.slane %v1165, 2
    %v1167 = vadd.f32 %v1165, %v1166
    %v1168 = vrot.slane %v1167, 1
    %v1169 = vadd.f32 %v1167, %v1168
    %v1170 = vsel %vm57, %v1160, 0.0
    %v1171 = vrot.slane %v1170, 4
    %v1172 = vadd.f32 %v1170, %v1171
    %v1173 = vrot.slane %v1172, 2
    %v1174 = vadd.f32 %v1172, %v1173
    %v1175 = vrot.slane %v1174, 1
    %v1176 = vadd.f32 %v1174, %v1175
    %v1177 = vsel %vm57, %v1161, 0.0
    %v1178 = vrot.slane %v1177, 4
    %v1179 = vadd.f32 %v1177, %v1178
    %v1180 = vrot.slane %v1179, 2
    %v1181 = vadd.f32 %v1179, %v1180
    %v1182 = vrot.slane %v1181, 1
    %v1183 = vadd.f32 %v1181, %v1182
    %v1184 = vsel %vm57, %v1162, 0.0
    %v1185 = vrot.slane %v1184, 4
    %v1186 = vadd.f32 %v1184, %v1185
    %v1187 = vrot.slane %v1186, 2
    %v1188 = vadd.f32 %v1186, %v1187
    %v1189 = vrot.slane %v1188, 1
    %v1190 = vadd.f32 %v1188, %v1189
    %vm1191 = vcmask 60416
    %v1192 = vsel %vm1191, %v35, 0.0
    %1193 = vadd.xlane.f32.xlu0 %v1192
    %v1194 = vpop.xlane.xlu0 %1193
    %v1195 = vmax.f32 %v1194, 1.0
    %v1196 = vrcp.pop %v1195
    %v1198 = vrot.slane %v1196, 1
    %v1199 = vrot.slane %v1196, 2
    %v1200 = vrot.slane %v1196, 3
    %v1205 = vmul.f32 %v1169, %v1196
    %v1206 = vmul.f32 %v1176, %v1198
    %v1207 = vmul.f32 %v1183, %v1199
    %v1208 = vmul.f32 %v1190, %v1200
    %v1209 = vsub.f32 %v1205, %v1207
    %v1210 = vsub.f32 %v1206, %v1208
    %v1211 = vand.u32 2147483647, %v1209
    %v1212 = vand.u32 2147483647, %v1210
    %v1215 = vrot.slane %v1206, 7
    %vm1216 = vcmask 1041409
    %v1217 = vsel %vm1216, %v1215, %v1205
    %v1221 = vrot.slane %v1208, 7
    %v1222 = vsel %vm1216, %v1221, %v1207
    %1223 = vrot.lane.b32.xlu0 %v1222, 32
    %v1224 = vpop.permute.xlu0 %1223
    %v1228 = vrot.slane %v1212, 7
    %v1229 = vsel %vm1216, %v1228, %v1211
    %1230 = vrot.lane.b32.xlu0 %v1229, 64
    %v1231 = vpop.permute.xlu0 %1230
    %v1233 = vsel %vm57, %v1217, %v1224
    %v1234 = vsel %vm1003, %v1233, %v1231
    %v1235 = vpack.c.bf16 %v1234, %v1234
    %v1236 = vld [vmem:[%s6] sm:$0xf]
    %v1237 = vld [vmem:[%s6 + $0x4] sm:$0xf]
    %v1238 = vld [vmem:[%s6 + $0x8] sm:$0xf]
    %v1239 = vld [vmem:[%s6 + $0xc] sm:$0xf]
    %v1240 = vld [vmem:[%s6 + $0x10] sm:$0xf]
    %v1241 = vld [vmem:[%s6 + $0x14] sm:$0xf]
    %v1242 = vld [vmem:[%s6 + $0x18] sm:$0xf]
    %v1243 = vld [vmem:[%s6 + $0x1c] sm:$0xf]
    %v1244 = vld [vmem:[%s6 + $0x20] sm:$0xf]
    %v1245 = vld [vmem:[%s6 + $0x24] sm:$0xf]
    %v1246 = vld [vmem:[%s6 + $0x28] sm:$0xf]
    %v1247 = vld [vmem:[%s6 + $0x2c] sm:$0xf]
    %v1248 = vperm.slane %v37, 4
    %v1261 = vunpack.c.l.b16 %v1236
    %v1262 = vunpack.c.l.b16 %v1237
    %v1263 = vunpack.c.l.b16 %v1238
    %v1264 = vunpack.c.l.b16 %v1239
    %v1265 = vunpack.c.l.b16 %v1240
    %v1266 = vunpack.c.l.b16 %v1241
    %v1267 = vunpack.c.l.b16 %v1242
    %v1268 = vunpack.c.l.b16 %v1243
    %v1269 = vunpack.c.l.b16 %v1244
    %v1270 = vunpack.c.l.b16 %v1245
    %v1271 = vunpack.c.l.b16 %v1246
    %v1272 = vunpack.c.l.b16 %v1247
    %v1273 = vpack.c.b16 %v1262, %v1261
    %v1274 = vpack.c.b16 %v1264, %v1263
    %v1275 = vpack.c.b16 %v1266, %v1265
    %v1276 = vpack.c.b16 %v1268, %v1267
    %v1277 = vpack.c.b16 %v1270, %v1269
    %v1278 = vpack.c.b16 %v1272, %v1271
    %vm1285 = vcmask 785408
    %v1287 = vsel %vm1285, %v1235, 0
    %1289 = vmatpush.bf16.msra.mxu0 0
    %1290 = vmatpush.bf16.msra.mxu0 0
    %1291 = vmatpush.bf16.msra.mxu0 %v1278
    %1292 = vmatpush.bf16.msra.mxu0 %v1277
    %1293 = vmatpush.bf16.msra.mxu0 %v1276
    %1294 = vmatpush.bf16.msra.mxu0 %v1275
    %1295 = vmatpush.bf16.msra.mxu0 %v1274
    %1296 = vmatpush.bf16.msra.mxu0 %v1273
    %1297 = vmatmul.bf16.gmra.mxu0 %v1287
    %v1298 = vpop.f32.mrf.mxu0
    %v1299 = vadd.f32 %v1248, %v1298
    %v1300 = vpop.f32.mrf.mxu0
    %1301 = vdwg.mxu0
    %1302 = vst [vmem:[#allocation2] sm:$0x3] %v1299
    // Predicated region
    $region34: #{forward.1} parent=1 // pred_check
      _
    $region35: #{forward.1} parent=1 // pred_check_branch
      %1304 = sbr.rel (0) target = $region37
    $region36: #{forward.1} parent=1 // pred_region
      %1306 = vsyncadd [#allocation3], 0
      %s1308 = sshll.u32 [#allocation2], 4
      %s1309 = int_to_ptr.vmem [resolvable:$true] %s1308
      %s1310 = sshll.u32 %s8, 4
      %s1311 = int_to_ptr.hbm [resolvable:$true] %s1310
      %1313 = dma.vmem_to_hbm [thread:$0]  %s1309, 32, %s1311, [#allocation3]
    $region37: #{forward.1} parent=1 // pred_fallthru
      _
    // Predicated region
    $region38: #{forward.1} parent=1 // pred_check
      _
    $region39: #{forward.1} parent=1 // pred_check_branch
      %1315 = sbr.rel (0) target = $region41
    $region40: #{forward.1} parent=1 // pred_region
      %1317 = dma.done [#allocation3], 32
    $region41: #{forward.1} parent=1 // pred_fallthru
      _
    %1318 = vsyncpa [#allocation3], 1

</llo_original>
